<compile_context>
chip_gen: v5e
topology: v5e:2x2
jax: 0.10.0
libtpu: 0.0.40
codegen_flags: <defaults>
</compile_context>

<pallas_src>
import jax
import jax.numpy as jnp
from jax.experimental import pallas as pl
from jax.experimental.pallas import tpu as pltpu


def _round_up(x, m):
    return (x + m - 1) // m * m


# ----------------------------------------------------------------------------
# Fused multi-layer GCN kernel
#   grid = (num_layers, num_row_tiles, num_k_tiles)
#   refs: x, Ws, bs, a_hat (inputs) | out | H, XW (VMEM scratch)
# ----------------------------------------------------------------------------
def _fused_gcn_kernel(x_ref, w_ref, b_ref, a_ref, o_ref, h_ref, xw_ref):
    l = pl.program_id(0)          # layer
    i = pl.program_id(1)          # row tile of A_hat / output
    k = pl.program_id(2)          # reduction tile over A_hat columns
    num_layers = pl.num_programs(0)
    nk = pl.num_programs(2)

    tm, tk = a_ref.shape
    cin_pad = x_ref.shape[1]
    cmax_pad = h_ref.shape[1]
    ch_pad = xw_ref.shape[1]

    # (1) Once at the very start: stage the input features into the resident
    #     activation buffer (zero any padded columns beyond Cin).
    @pl.when((l == 0) & (i == 0) & (k == 0))
    def _init_h():
        if cin_pad == cmax_pad:
            h_ref[...] = x_ref[...]
        else:
            h_ref[...] = jnp.zeros_like(h_ref)
            h_ref[:, :cin_pad] = x_ref[...]

    # (2) Once per layer: XW = H @ W_l  (bf16 MXU, f32 accumulate, stored bf16).
    @pl.when((i == 0) & (k == 0))
    def _compute_xw():
        xw = jnp.dot(h_ref[...], w_ref[0], preferred_element_type=jnp.float32)
        xw_ref[...] = xw.astype(xw_ref.dtype)

    # (3) Zero the f32 accumulator (the output VMEM block) at the start of the
    #     k reduction for this row tile.
    @pl.when(k == 0)
    def _zero_acc():
        o_ref[...] = jnp.zeros_like(o_ref)

    # (4) Accumulate the (tm, tk) x (tk, Ch) partial product on the MXU.
    k0 = pl.multiple_of(k * tk, tk)
    o_ref[...] += jnp.dot(a_ref[...], xw_ref[pl.ds(k0, tk), :],
                          preferred_element_type=jnp.float32)

    # (5) Finalize this row tile: bias (+ relu except on the last layer),
    #     and write the rows back into the resident activation H for the
    #     next layer.
    @pl.when(k == nk - 1)
    def _finalize():
        out = o_ref[...] + b_ref[0]
        out = jnp.where(l < num_layers - 1, jnp.maximum(out, 0.0), out)
        o_ref[...] = out
        r0 = pl.multiple_of(i * tm, tm)
        if ch_pad == cmax_pad:
            h_ref[pl.ds(r0, tm), :] = out.astype(h_ref.dtype)
        else:
            h_ref[pl.ds(r0, tm), :ch_pad] = out.astype(h_ref.dtype)


def fused_gcn_forward(a_pad, x_pad, ws, bs, *, tm=128, tk=128):
    """All GCN layers in one pallas_call; padded inputs, padded f32 output."""
    num_layers, cmax_pad, ch_pad = ws.shape
    n_pad, cin_pad = x_pad.shape
    assert a_pad.shape == (n_pad, n_pad)
    assert n_pad % tm == 0 and n_pad % tk == 0

    grid = (num_layers, n_pad // tm, n_pad // tk)

    flops = num_layers * (2 * n_pad * n_pad * ch_pad
                          + 2 * n_pad * cmax_pad * ch_pad)
    bytes_accessed = (num_layers * n_pad * n_pad * 2      # A_hat per layer (bf16)
                      + n_pad * cin_pad * 2                # x (bf16)
                      + num_layers * cmax_pad * ch_pad * 2  # Ws
                      + num_layers * ch_pad * 4             # bs
                      + n_pad * ch_pad * 4)                 # out

    grid_spec = pltpu.PrefetchScalarGridSpec(
        num_scalar_prefetch=0,
        grid=grid,
        in_specs=[
            # x: whole array, constant block index -> DMA'd once, stays in VMEM
            pl.BlockSpec((n_pad, cin_pad), lambda l, i, k: (0, 0)),
            # W_l: one layer slab per layer step
            pl.BlockSpec((1, cmax_pad, ch_pad), lambda l, i, k: (l, 0, 0)),
            # b_l
            pl.BlockSpec((1, 1, ch_pad), lambda l, i, k: (l, 0, 0)),
            # A_hat: streamed (tm, tk) tiles, pipelined against the MXU
            pl.BlockSpec((tm, tk), lambda l, i, k: (i, k)),
        ],
        out_specs=pl.BlockSpec((tm, ch_pad), lambda l, i, k: (i, 0)),
        scratch_shapes=[
            pltpu.VMEM((n_pad, cmax_pad), jnp.bfloat16),   # H (resident activations)
            pltpu.VMEM((n_pad, ch_pad), jnp.bfloat16),     # XW of the current layer
        ],
    )

    return pl.pallas_call(
        _fused_gcn_kernel,
        out_shape=jax.ShapeDtypeStruct((n_pad, ch_pad), jnp.float32),
        grid_spec=grid_spec,
        compiler_params=pltpu.CompilerParams(
            # Layers are sequential and H/XW are core-local scratch, so all
            # axes must be "arbitrary" (see TODO above re: v7x megacore).
            dimension_semantics=("arbitrary", "arbitrary", "arbitrary")),
        cost_estimate=pl.CostEstimate(flops=flops, transcendentals=0,
                                      bytes_accessed=bytes_accessed),
    )(x_pad, ws, bs, a_pad)


# ----------------------------------------------------------------------------
# Glue: symmetrically-normalized (weighted) adjacency with self-loops
# ----------------------------------------------------------------------------
def gcn_norm_dense(edge_index, edge_weight, num_nodes):
    row, col = edge_index[0], edge_index[1]
    loop = jnp.arange(num_nodes, dtype=edge_index.dtype)
    row = jnp.concatenate([row, loop])
    col = jnp.concatenate([col, loop])
    w = jnp.concatenate(
        [edge_weight.astype(jnp.float32), jnp.ones((num_nodes,), jnp.float32)]
    )
    deg = jnp.zeros((num_nodes,), jnp.float32).at[col].add(w)
    dinv = jnp.where(deg > 0.0, jax.lax.rsqrt(deg), 0.0)
    norm = dinv[row] * w * dinv[col]
    # message flows source(row) -> target(col):  out[col] += norm * x[row]
    a_hat = jnp.zeros((num_nodes, num_nodes), jnp.float32).at[col, row].add(norm)
    return a_hat
    # TODO(synk): for large/sparse graphs, replace the dense A_hat with a
    # scalar-prefetch gather formulation (O(E) instead of O(N^2)).


# ----------------------------------------------------------------------------
# Model: parameter init + forward
# ----------------------------------------------------------------------------
def glorot(key, fan_in, fan_out):
    limit = jnp.sqrt(6.0 / (fan_in + fan_out))
    return jax.random.uniform(
        key, (fan_in, fan_out), jnp.float32, minval=-limit, maxval=limit
    )


def init_params(key, in_channels, hidden_channels, num_layers):
    dims = [in_channels] + [hidden_channels] * num_layers
    params = []
    for i in range(num_layers):
        key, sub = jax.random.split(key)
        w = glorot(sub, dims[i], dims[i + 1])
        b = jnp.zeros((dims[i + 1],), jnp.float32)  # GCNConv bias init: zeros
        params.append((w, b))
    return params


def link_level_gcn_forward(params, x, edge_index, edge_type, *, tm=128, tk=128):
    """Inference forward pass of LinkLevelGCN (dropout = identity in eval)."""
    # TODO(synk): training-mode dropout not implemented (eval semantics only).
    n, cin = x.shape
    ch = params[0][0].shape[1]
    num_layers = len(params)

    n_pad = _round_up(n, max(tm, tk))
    cin_pad = _round_up(cin, 128)
    ch_pad = _round_up(ch, 128)
    cmax_pad = max(cin_pad, ch_pad)

    a_hat = gcn_norm_dense(edge_index, edge_type, n)
    a_pad = (jnp.zeros((n_pad, n_pad), jnp.float32)
             .at[:n, :n].set(a_hat).astype(jnp.bfloat16))
    x_pad = (jnp.zeros((n_pad, cin_pad), jnp.float32)
             .at[:n, :cin].set(x.astype(jnp.float32)).astype(jnp.bfloat16))

    ws, bs = [], []
    for w, b in params:
        wp = jnp.zeros((cmax_pad, ch_pad), jnp.float32).at[
            : w.shape[0], : w.shape[1]].set(w)
        bp = jnp.zeros((1, ch_pad), jnp.float32).at[0, : b.shape[0]].set(b)
        ws.append(wp)
        bs.append(bp)
    ws = jnp.stack(ws).astype(jnp.bfloat16)   # (L, cmax_pad, ch_pad)
    bs = jnp.stack(bs)                        # (L, 1, ch_pad) f32

    out_pad = fused_gcn_forward(a_pad, x_pad, ws, bs, tm=tm, tk=tk)
    return out_pad[:n, :ch]


# ----------------------------------------------------------------------------
# Reference (pure jnp, f32) for a sanity check
# ----------------------------------------------------------------------------
def reference_forward(params, x, edge_index, edge_type):
    a_hat = gcn_norm_dense(edge_index, edge_type, x.shape[0])
    h = x.astype(jnp.float32)
    for i, (w, b) in enumerate(params):
        h = a_hat @ (h @ w) + b
        if i != len(params) - 1:
            h = jnp.maximum(h, 0.0)
    return h


if __name__ == "__main__":
    # Small but lane/MXU-friendly shapes (module defaults are 384 -> 128).
    num_nodes = 200          # pads to 256 -> grid of 2x2 A_hat tiles
    in_channels = 256
    hidden_channels = 128
    num_layers = 2
    num_edges = 600

    key = jax.random.PRNGKey(0)
    kx, ke, kt, kp = jax.random.split(key, 4)

    x = jax.random.normal(kx, (num_nodes, in_channels), jnp.float32)
    edge_index = jax.random.randint(ke, (2, num_edges), 0, num_nodes, jnp.int32)
    edge_type = jax.random.randint(kt, (num_edges,), 0, 3, jnp.int32)

    params = init_params(kp, in_channels, hidden_channels, num_layers)

    out = link_level_gcn_forward(params, x, edge_index, edge_type)
    out = jax.block_until_ready(out)

    ref = reference_forward(params, x, edge_index, edge_type)
    assert out.shape == (num_nodes, hidden_channels)
    # bf16 matmuls with f32 accumulation -> tolerance loosened vs the f32 reference.
    assert jnp.allclose(out, ref, atol=1e-1, rtol=1e-1), "mismatch vs reference"
    assert float(jnp.mean(jnp.abs(out - ref))) < 2e-2, "mean error too large"

    print("KERNEL_OK")
</pallas_src>

<mosaic_0001>
module attributes {stable_mosaic.version = 11 : i64} {
  func.func @_fused_gcn_kernel(%arg0: i32, %arg1: i32, %arg2: i32, %arg3: memref<256x256xbf16, #tpu.memory_space<vmem>>, %arg4: memref<1x256x128xbf16, #tpu.memory_space<vmem>>, %arg5: memref<1x1x128xf32, #tpu.memory_space<vmem>>, %arg6: memref<128x128xbf16, #tpu.memory_space<vmem>>, %arg7: memref<128x128xf32, #tpu.memory_space<vmem>>, %arg8: memref<256x256xbf16, #tpu.memory_space<vmem>>, %arg9: memref<256x128xbf16, #tpu.memory_space<vmem>>) attributes {dimension_semantics = [#tpu.dimension_semantics<arbitrary>, #tpu.dimension_semantics<arbitrary>, #tpu.dimension_semantics<arbitrary>], iteration_bounds = array<i64: 2, 2, 2>, scalar_prefetch = 0 : i64, scratch_operands = 2 : i64, tpu.core_type = #tpu.core_type<tc>, window_params = [{pipeline_mode = #tpu.pipeline_mode<synchronous>, transform_indices = @transform_0, window_bounds = array<i64: 256, 256>}, {transform_indices = @transform_1, window_bounds = array<i64: 1, 256, 128>}, {transform_indices = @transform_2, window_bounds = array<i64: 1, 1, 128>}, {transform_indices = @transform_3, window_bounds = array<i64: 128, 128>}, {transform_indices = @transform_4, window_bounds = array<i64: 128, 128>}]} {
    %c0_i32 = arith.constant 0 : i32
    %0 = arith.cmpi eq, %arg0, %c0_i32 : i32
    %c0_i32_0 = arith.constant 0 : i32
    %1 = arith.cmpi eq, %arg1, %c0_i32_0 : i32
    %2 = arith.andi %0, %1 : i1
    %c0_i32_1 = arith.constant 0 : i32
    %3 = arith.cmpi eq, %arg2, %c0_i32_1 : i32
    %4 = arith.andi %2, %3 : i1
    %5 = arith.extui %4 : i1 to i32
    %c0_i32_2 = arith.constant 0 : i32
    %6 = arith.cmpi ne, %5, %c0_i32_2 : i32
    scf.if %6 {
      %c0_15 = arith.constant 0 : index
      %c0_16 = arith.constant 0 : index
      %27 = vector.load %arg3[%c0_15, %c0_16] : memref<256x256xbf16, #tpu.memory_space<vmem>>, vector<256x256xbf16>
      %c0_17 = arith.constant 0 : index
      %c0_18 = arith.constant 0 : index
      %28 = vector.load %arg8[%c0_17, %c0_18] : memref<256x256xbf16, #tpu.memory_space<vmem>>, vector<256x256xbf16>
      tpu.vector_store %arg8[%c0_17, %c0_18], %27 {strides = array<i32>} : memref<256x256xbf16, #tpu.memory_space<vmem>>, vector<256x256xbf16>,
    } else {
    }
    %c0_i32_3 = arith.constant 0 : i32
    %7 = arith.cmpi eq, %arg1, %c0_i32_3 : i32
    %c0_i32_4 = arith.constant 0 : i32
    %8 = arith.cmpi eq, %arg2, %c0_i32_4 : i32
    %9 = arith.andi %7, %8 : i1
    %10 = arith.extui %9 : i1 to i32
    %c0_i32_5 = arith.constant 0 : i32
    %11 = arith.cmpi ne, %10, %c0_i32_5 : i32
    scf.if %11 {
      %c0_15 = arith.constant 0 : index
      %c0_16 = arith.constant 0 : index
      %27 = vector.load %arg8[%c0_15, %c0_16] : memref<256x256xbf16, #tpu.memory_space<vmem>>, vector<256x256xbf16>
      %c0_17 = arith.constant 0 : index
      %c0_18 = arith.constant 0 : index
      %c0_19 = arith.constant 0 : index
      %28 = vector.load %arg4[%c0_17, %c0_18, %c0_19] : memref<1x256x128xbf16, #tpu.memory_space<vmem>>, vector<1x256x128xbf16>
      %29 = vector.shape_cast %28 : vector<1x256x128xbf16> to vector<256x128xbf16>
      %cst_20 = arith.constant dense<0.000000e+00> : vector<256x128xf32>
      %30 = tpu.matmul %27, %29, %cst_20 {dimension_numbers = #tpu.dot_dimension_numbers<[1], [0], [0], [1], [0, 0, 1, 1], [], []>} : vector<256x256xbf16>, vector<256x128xbf16>, vector<256x128xf32> -> vector<256x128xf32>
      %31 = arith.truncf %30 : vector<256x128xf32> to vector<256x128xbf16>
      %c0_21 = arith.constant 0 : index
      %c0_22 = arith.constant 0 : index
      %32 = vector.load %arg9[%c0_21, %c0_22] : memref<256x128xbf16, #tpu.memory_space<vmem>>, vector<256x128xbf16>
      tpu.vector_store %arg9[%c0_21, %c0_22], %31 {strides = array<i32>} : memref<256x128xbf16, #tpu.memory_space<vmem>>, vector<256x128xbf16>,
    } else {
    }
    %c0_i32_6 = arith.constant 0 : i32
    %12 = arith.cmpi eq, %arg2, %c0_i32_6 : i32
    %13 = arith.extui %12 : i1 to i32
    %c0_i32_7 = arith.constant 0 : i32
    %14 = arith.cmpi ne, %13, %c0_i32_7 : i32
    scf.if %14 {
      %cst_15 = arith.constant 0.000000e+00 : f32
      %27 = vector.broadcast %cst_15 : f32 to vector<128x128xf32>
      %c0_16 = arith.constant 0 : index
      %c0_17 = arith.constant 0 : index
      %28 = vector.load %arg7[%c0_16, %c0_17] : memref<128x128xf32, #tpu.memory_space<vmem>>, vector<128x128xf32>
      tpu.vector_store %arg7[%c0_16, %c0_17], %27 {strides = array<i32>} : memref<128x128xf32, #tpu.memory_space<vmem>>, vector<128x128xf32>,
    } else {
    }
    %c128_i32 = arith.constant 128 : i32
    %15 = arith.muli %arg2, %c128_i32 : i32
    %16 = tpu.assume_multiple %15, 128 : i32
    %c0 = arith.constant 0 : index
    %c0_8 = arith.constant 0 : index
    %17 = vector.load %arg7[%c0, %c0_8] : memref<128x128xf32, #tpu.memory_space<vmem>>, vector<128x128xf32>
    %c0_9 = arith.constant 0 : index
    %c0_10 = arith.constant 0 : index
    %18 = vector.load %arg6[%c0_9, %c0_10] : memref<128x128xbf16, #tpu.memory_space<vmem>>, vector<128x128xbf16>
    %19 = arith.index_cast %16 : i32 to index
    %c0_11 = arith.constant 0 : index
    %20 = vector.load %arg9[%19, %c0_11] : memref<256x128xbf16, #tpu.memory_space<vmem>>, vector<128x128xbf16>
    %cst = arith.constant dense<0.000000e+00> : vector<128x128xf32>
    %21 = tpu.matmul %18, %20, %cst {dimension_numbers = #tpu.dot_dimension_numbers<[1], [0], [0], [1], [0, 0, 1, 1], [], []>} : vector<128x128xbf16>, vector<128x128xbf16>, vector<128x128xf32> -> vector<128x128xf32>
    %22 = arith.addf %17, %21 : vector<128x128xf32>
    %c0_12 = arith.constant 0 : index
    %c0_13 = arith.constant 0 : index
    %23 = vector.load %arg7[%c0_12, %c0_13] : memref<128x128xf32, #tpu.memory_space<vmem>>, vector<128x128xf32>
    tpu.vector_store %arg7[%c0_12, %c0_13], %22 {strides = array<i32>} : memref<128x128xf32, #tpu.memory_space<vmem>>, vector<128x128xf32>,
    %c1_i32 = arith.constant 1 : i32
    %24 = arith.cmpi eq, %arg2, %c1_i32 : i32
    %25 = arith.extui %24 : i1 to i32
    %c0_i32_14 = arith.constant 0 : i32
    %26 = arith.cmpi ne, %25, %c0_i32_14 : i32
    scf.if %26 {
      %c0_15 = arith.constant 0 : index
      %c0_16 = arith.constant 0 : index
      %27 = vector.load %arg7[%c0_15, %c0_16] : memref<128x128xf32, #tpu.memory_space<vmem>>, vector<128x128xf32>
      %c0_17 = arith.constant 0 : index
      %c0_18 = arith.constant 0 : index
      %c0_19 = arith.constant 0 : index
      %28 = vector.load %arg5[%c0_17, %c0_18, %c0_19] : memref<1x1x128xf32, #tpu.memory_space<vmem>>, vector<1x1x128xf32>
      %29 = vector.shape_cast %28 : vector<1x1x128xf32> to vector<1x128xf32>
      %30 = vector.broadcast %29 : vector<1x128xf32> to vector<128x128xf32>
      %31 = arith.addf %27, %30 : vector<128x128xf32>
      %c1_i32_20 = arith.constant 1 : i32
      %32 = arith.cmpi slt, %arg0, %c1_i32_20 : i32
      %cst_21 = arith.constant 0.000000e+00 : f32
      %33 = vector.broadcast %cst_21 : f32 to vector<128x128xf32>
      %34 = arith.maximumf %31, %33 : vector<128x128xf32>
      %35 = arith.select %32, %34, %31 : vector<128x128xf32>
      %c0_22 = arith.constant 0 : index
      %c0_23 = arith.constant 0 : index
      %36 = vector.load %arg7[%c0_22, %c0_23] : memref<128x128xf32, #tpu.memory_space<vmem>>, vector<128x128xf32>
      tpu.vector_store %arg7[%c0_22, %c0_23], %35 {strides = array<i32>} : memref<128x128xf32, #tpu.memory_space<vmem>>, vector<128x128xf32>,
      %c128_i32_24 = arith.constant 128 : i32
      %37 = arith.muli %arg1, %c128_i32_24 : i32
      %38 = tpu.assume_multiple %37, 128 : i32
      %39 = arith.truncf %35 : vector<128x128xf32> to vector<128x128xbf16>
      %40 = arith.index_cast %38 : i32 to index
      %c0_25 = arith.constant 0 : index
      %41 = vector.load %arg8[%40, %c0_25] : memref<256x256xbf16, #tpu.memory_space<vmem>>, vector<128x128xbf16>
      tpu.vector_store %arg8[%40, %c0_25], %39 {strides = array<i32>} : memref<256x256xbf16, #tpu.memory_space<vmem>>, vector<128x128xbf16>,
    } else {
    }
    return
  }
  func.func @transform_0(%arg0: i32, %arg1: i32, %arg2: i32) -> (i32, i32) {
    %c0_i32 = arith.constant 0 : i32
    %c0_i32_0 = arith.constant 0 : i32
    %c0_i32_1 = arith.constant 0 : i32
    return %c0_i32, %c0_i32_0 : i32, i32
  }
  func.func @transform_1(%arg0: i32, %arg1: i32, %arg2: i32) -> (i32, i32, i32) {
    %c0_i32 = arith.constant 0 : i32
    %c0_i32_0 = arith.constant 0 : i32
    %c0_i32_1 = arith.constant 0 : i32
    return %arg0, %c0_i32, %c0_i32_0 : i32, i32, i32
  }
  func.func @transform_2(%arg0: i32, %arg1: i32, %arg2: i32) -> (i32, i32, i32) {
    %c0_i32 = arith.constant 0 : i32
    %c0_i32_0 = arith.constant 0 : i32
    %c0_i32_1 = arith.constant 0 : i32
    return %arg0, %c0_i32, %c0_i32_0 : i32, i32, i32
  }
  func.func @transform_3(%arg0: i32, %arg1: i32, %arg2: i32) -> (i32, i32) {
    %c0_i32 = arith.constant 0 : i32
    return %arg1, %arg2 : i32, i32
  }
  func.func @transform_4(%arg0: i32, %arg1: i32, %arg2: i32) -> (i32, i32) {
    %c0_i32 = arith.constant 0 : i32
    %c0_i32_0 = arith.constant 0 : i32
    return %arg1, %c0_i32 : i32, i32
  }
}

</mosaic_0001>

<llo_original>
// kernel: tpu_custom_call.1
$region0: #{tpu_custom_call.1}
  #allocation0 [shape = 'u32[]', space=smem, size = 0x4, offset = 0x4, fixed_abs, tag = 'smem constant byte address 0x4 - core index']
  #allocation1 [shape = 'u32[72,128]{1,0:T(1,128)}', space=vmem, size = 0x9000, scoped, tag = 'internal scratch']
  #allocation2 [shape = 'bf16[256,256]{1,0:T(8,128)(2,1)}', space=vmem, size = 0x20000, scoped, tag = 'scratch operand']
  #allocation3 [shape = 'bf16[256,128]{1,0:T(8,128)(2,1)}', space=vmem, size = 0x10000, scoped, tag = 'scratch operand']
  %s0 = inlined_call_operand.hbm [shape: bf16[256,256], index: 0, kind: input, shape index: {}]
  %s1 = inlined_call_operand.hbm [shape: bf16[2,256,128], index: 1, kind: input, shape index: {}]
  %s2 = inlined_call_operand.hbm [shape: f32[2,1,128], index: 2, kind: input, shape index: {}]
  %s3 = inlined_call_operand.hbm [shape: bf16[256,256], index: 3, kind: input, shape index: {}]
  %s4 = inlined_call_operand.hbm [shape: f32[256,128], index: 4, kind: output, shape index: {}]
  %s5 = sld [smem:[#allocation0]]
  $region81: #{tpu_custom_call.1} parent=0
    _
  %s7 = ssub.s32 1, %s5
  %s8 = scalar_select 0, %s7, %s5
  $region1: #{tpu_custom_call.1} parent=0
    #allocation4 [shape = 'u8[131072]{0}', space=vmem, size = 0x20000, scoped, tag = 'input window, operand 0, single buffered']
    #allocation5 [shape = 's32[2]{0}', space=sflag, size = 0x8, scoped, tag = 'scoped memory for tpu_custom_call.1']
    #allocation6 [shape = 's32[2]{0}', space=sflag, size = 0x8, scoped, tag = 'scoped memory for tpu_custom_call.1']
    #allocation7 [shape = 'u8[131072]{0}', space=vmem, size = 0x20000, scoped, tag = 'input window, operand 1']
    #allocation8 [shape = 's32[2]{0}', space=sflag, size = 0x8, scoped, tag = 'scoped memory for tpu_custom_call.1']
    #allocation9 [shape = 'u8[1024]{0}', space=vmem, size = 0x400, scoped, tag = 'input window, operand 2']
    #allocation10 [shape = 'u8[65536]{0}', space=vmem, size = 0x10000, scoped, tag = 'input window, operand 3']
    #allocation11 [shape = 's32[2]{0}', space=sflag, size = 0x8, scoped, tag = 'scoped memory for tpu_custom_call.1']
    #allocation12 [shape = 'u8[131072]{0}', space=vmem, size = 0x20000, scoped, tag = 'output window, operand 0']
    %9 = vsyncpa [#allocation5], 0
    %10 = vsyncpa [#allocation8], 0
    %s11 = scalar_lea.sflag [#allocation8], 1
    %12 = vsyncpa %s11, 0
    %13 = vsyncpa [#allocation11], 0
    %s14 = scalar_lea.sflag [#allocation11], 1
    %15 = vsyncpa %s14, 0
    %16 = vsyncpa [#allocation6], 0
    %s17 = scalar_lea.sflag [#allocation6], 1
    %18 = vsyncpa %s17, 0
    loop: start=0, step=1, limit=10
    $region2: #{tpu_custom_call.1} parent=1 // loop_pre_header
      _
    $region3: #{tpu_custom_call.1} parent=1 // loop_header
      %s20 = sphi 0, %s24
      %p21 = scmp.ge.s32.totalorder %s20, 10
      %s27 = sphi 0, %s46
      %s28 = sphi 0, %s42
      %s29 = sphi 0, %s38
      %s30 = sphi 0, %s27
      %s31 = sphi 0, %s28
      %s32 = sphi 0, %s29
      %s33 = sphi 0, %s30
      %s34 = sphi 0, %s31
      %s35 = sphi 0, %s32
      %s47 = sphi 0, %s47
      %s49 = sphi 0, %s47
      %s50 = sphi 0, %s49
      %s64 = sphi 0, %s50
      %s70 = sphi 0, %s72
      %s73 = sphi 0, %s70
      %s74 = sphi 0, %s73
      %s90 = sphi 0, %s74
      %s96 = sphi 0, %s98
      %s99 = sphi 0, %s96
      %s100 = sphi 0, %s99
      %s116 = sphi 0, %s100
      %s124 = sphi 0, %s126
      %s127 = sphi 0, %s124
      %s128 = sphi 0, %s127
      %s144 = sphi 0, %s128
      %s150 = sphi 0, %s152
      %s153 = sphi 0, %s150
      %s154 = sphi 0, %s153
      %s170 = sphi 0, %s154
    $region4: #{tpu_custom_call.1} parent=1 // loop_header_branch
      %23 = sbr.rel (%p21) target = $region8
    $region5: #{tpu_custom_call.1} parent=1 // loop_body
      %s25 = ssub.s32 %s20, 1
      %s26 = ssub.s32 %s20, 2
      %s36 = sadd.s32 1, %s29
      %p37 = scmp.ge.s32.totalorder %s36, 2
      %s38 = scalar_select %p37, 0, %s36
      %s39 = sadd.s32 1, %s28
      %s40 = scalar_select %p37, %s39, %s28
      %p41 = scmp.ge.s32.totalorder %s40, 2
      %s42 = scalar_select %p41, 0, %s40
      %s43 = sadd.s32 1, %s27
      %s44 = scalar_select %p41, %s43, %s27
      %p45 = scmp.ge.s32.totalorder %s44, 2
      %s46 = scalar_select %p45, 0, %s44
      %s48 = sadd.s32 %s47, 1
      %p51 = scmp.eq.s32.totalorder %s20, 7
      %p52 = scmp.ne.s32.totalorder %s47, %s49
      %p53 = scmp.eq.s32.totalorder %s20, 0
      %p54 = por %p52, %p53
      %p55 = scmp.ne.s32.totalorder %s47, %s49
      %p56 = scmp.eq.s32.totalorder %s25, 7
      %p57 = por %p55, %p56
      %p58 = scmp.ne.s32.totalorder %s49, %s50
      %p59 = scmp.eq.s32.totalorder %s25, 0
      %p60 = por %p58, %p59
      %p61 = scmp.ne.s32.totalorder %s49, %s50
      %p62 = scmp.eq.s32.totalorder %s26, 7
      %p63 = por %p61, %p62
      %p65 = scmp.ne.s32.totalorder %s50, %s64
      %p66 = scmp.eq.s32.totalorder %s26, 0
      %p67 = por %p65, %p66
      %s68 = ssub.s32 %s27, %s46
      %p69 = scmp.eq.s32.totalorder %s68, 0
      %s71 = sadd.s32 %s70, 1
      %s72 = scalar_select %p69, %s70, %s71
      %p75 = pneg %p69
      %p76 = scmp.eq.s32.totalorder %s20, 7
      %p77 = por %p75, %p76
      %p78 = scmp.ne.s32.totalorder %s70, %s73
      %p79 = scmp.eq.s32.totalorder %s20, 0
      %p80 = por %p78, %p79
      %p81 = scmp.ne.s32.totalorder %s70, %s73
      %p82 = scmp.eq.s32.totalorder %s25, 7
      %p83 = por %p81, %p82
      %p84 = scmp.ne.s32.totalorder %s73, %s74
      %p85 = scmp.eq.s32.totalorder %s25, 0
      %p86 = por %p84, %p85
      %p87 = scmp.ne.s32.totalorder %s73, %s74
      %p88 = scmp.eq.s32.totalorder %s26, 7
      %p89 = por %p87, %p88
      %p91 = scmp.ne.s32.totalorder %s74, %s90
      %p92 = scmp.eq.s32.totalorder %s26, 0
      %p93 = por %p91, %p92
      %s94 = ssub.s32 %s27, %s46
      %p95 = scmp.eq.s32.totalorder %s94, 0
      %s97 = sadd.s32 %s96, 1
      %s98 = scalar_select %p95, %s96, %s97
      %p101 = pneg %p95
      %p102 = scmp.eq.s32.totalorder %s20, 7
      %p103 = por %p101, %p102
      %p104 = scmp.ne.s32.totalorder %s96, %s99
      %p105 = scmp.eq.s32.totalorder %s20, 0
      %p106 = por %p104, %p105
      %p107 = scmp.ne.s32.totalorder %s96, %s99
      %p108 = scmp.eq.s32.totalorder %s25, 7
      %p109 = por %p107, %p108
      %p110 = scmp.ne.s32.totalorder %s99, %s100
      %p111 = scmp.eq.s32.totalorder %s25, 0
      %p112 = por %p110, %p111
      %p113 = scmp.ne.s32.totalorder %s99, %s100
      %p114 = scmp.eq.s32.totalorder %s26, 7
      %p115 = por %p113, %p114
      %p117 = scmp.ne.s32.totalorder %s100, %s116
      %p118 = scmp.eq.s32.totalorder %s26, 0
      %p119 = por %p117, %p118
      %s120 = ssub.s32 %s28, %s42
      %s121 = ssub.s32 %s29, %s38
      %s122 = sor.u32 %s120, %s121
      %p123 = scmp.eq.s32.totalorder %s122, 0
      %s125 = sadd.s32 %s124, 1
      %s126 = scalar_select %p123, %s124, %s125
      %p129 = pneg %p123
      %p130 = scmp.eq.s32.totalorder %s20, 7
      %p131 = por %p129, %p130
      %p132 = scmp.ne.s32.totalorder %s124, %s127
      %p133 = scmp.eq.s32.totalorder %s20, 0
      %p134 = por %p132, %p133
      %p135 = scmp.ne.s32.totalorder %s124, %s127
      %p136 = scmp.eq.s32.totalorder %s25, 7
      %p137 = por %p135, %p136
      %p138 = scmp.ne.s32.totalorder %s127, %s128
      %p139 = scmp.eq.s32.totalorder %s25, 0
      %p140 = por %p138, %p139
      %p141 = scmp.ne.s32.totalorder %s127, %s128
      %p142 = scmp.eq.s32.totalorder %s26, 7
      %p143 = por %p141, %p142
      %p145 = scmp.ne.s32.totalorder %s128, %s144
      %p146 = scmp.eq.s32.totalorder %s26, 0
      %p147 = por %p145, %p146
      %s148 = ssub.s32 %s28, %s42
      %p149 = scmp.eq.s32.totalorder %s148, 0
      %s151 = sadd.s32 %s150, 1
      %s152 = scalar_select %p149, %s150, %s151
      %p155 = pneg %p149
      %p156 = scmp.eq.s32.totalorder %s20, 7
      %p157 = por %p155, %p156
      %p158 = scmp.ne.s32.totalorder %s150, %s153
      %p159 = scmp.eq.s32.totalorder %s20, 0
      %p160 = por %p158, %p159
      %p161 = scmp.ne.s32.totalorder %s150, %s153
      %p162 = scmp.eq.s32.totalorder %s25, 7
      %p163 = por %p161, %p162
      %p164 = scmp.ne.s32.totalorder %s153, %s154
      %p165 = scmp.eq.s32.totalorder %s25, 0
      %p166 = por %p164, %p165
      %p167 = scmp.ne.s32.totalorder %s153, %s154
      %p168 = scmp.eq.s32.totalorder %s26, 7
      %p169 = por %p167, %p168
      %p171 = scmp.ne.s32.totalorder %s154, %s170
      %p172 = scmp.eq.s32.totalorder %s26, 0
      %p173 = por %p171, %p172
      %p174 = scmp.le.s32.totalorder 1, %s20
      %p175 = scmp.lt.s32.totalorder %s20, 9
      %p176 = pnand %p174, %p175
      %p177 = pneg %p176
      // Predicated region
      $region9: #{tpu_custom_call.1} parent=5 // pred_check
        _
      $region10: #{tpu_custom_call.1} parent=5 // pred_check_branch
        %179 = sbr.rel (%p176) target = $region12
      $region11: #{tpu_custom_call.1} parent=5 // pred_region
        %s180 = ssub.s32 %s20, 1
        // Predicated region
        $region13: #{tpu_custom_call.1} parent=11 // pred_check
          %p181 = pneg %p60
        $region14: #{tpu_custom_call.1} parent=11 // pred_check_branch
          %183 = sbr.rel (%p181) target = $region16
        $region15: #{tpu_custom_call.1} parent=11 // pred_region
          %185 = vsyncadd [#allocation5], 0
          %s186 = sshll.u32 %s0, 4
          %s187 = int_to_ptr.hbm [resolvable:$true] %s186
          %s188 = sshll.u32 [#allocation4], 4
          %s189 = int_to_ptr.vmem [resolvable:$true] %s188
          %194 = dma.hbm_to_vmem [thread:$0]  %s187, 4096, %s189, [#allocation5], 128, 128, 8
        $region16: #{tpu_custom_call.1} parent=11 // pred_fallthru
          _
      $region12: #{tpu_custom_call.1} parent=5 // pred_fallthru
        _
      %p195 = scmp.lt.s32.totalorder %s20, 8
      // Predicated region
      $region17: #{tpu_custom_call.1} parent=5 // pred_check
        %p196 = pneg %p195
      $region18: #{tpu_custom_call.1} parent=5 // pred_check_branch
        %198 = sbr.rel (%p196) target = $region20
      $region19: #{tpu_custom_call.1} parent=5 // pred_region
        // Predicated region
        $region21: #{tpu_custom_call.1} parent=19 // pred_check
          %p199 = pneg %p80
        $region22: #{tpu_custom_call.1} parent=19 // pred_check_branch
          %201 = sbr.rel (%p199) target = $region24
        $region23: #{tpu_custom_call.1} parent=19 // pred_region
          %s202 = sand.u32 %s20, 1
          %s203 = scalar_lea.sflag [#allocation8], %s202
          %s204 = sand.u32 %s70, 1
          %s205 = smul.addr %s204, 128
          %s206 = scalar_lea.vmem [#allocation7], %s205
          %208 = vsyncadd %s203, 0
          %s209 = smul.addr %s27, 32
          %s210 = smul.addr %s209, 4
          %s211 = scalar_lea.hbm %s1, %s210
          %s212 = sshll.u32 %s211, 4
          %s213 = int_to_ptr.hbm [resolvable:$true] %s212
          %s214 = sshll.u32 %s206, 4
          %s215 = int_to_ptr.vmem [resolvable:$true] %s214
          %220 = dma.hbm_to_vmem [thread:$0]  %s213, 2048, %s215, %s203, 64, 64, 4
        $region24: #{tpu_custom_call.1} parent=19 // pred_fallthru
          _
        // Predicated region
        $region25: #{tpu_custom_call.1} parent=19 // pred_check
          %p221 = pneg %p106
        $region26: #{tpu_custom_call.1} parent=19 // pred_check_branch
          %223 = sbr.rel (%p221) target = $region28
        $region27: #{tpu_custom_call.1} parent=19 // pred_region
          %s224 = sand.u32 %s20, 1
          %s225 = scalar_lea.sflag [#allocation8], %s224
          %s226 = sand.u32 %s96, 1
          %s227 = scalar_lea.vmem [#allocation9], %s226
          %229 = vsyncadd %s225, 0
          %s230 = scalar_lea.hbm %s2, %s27
          %s232 = sshll.u32 %s230, 4
          %s233 = int_to_ptr.hbm [resolvable:$true] %s232
          %s234 = sshll.u32 %s227, 4
          %s235 = int_to_ptr.vmem [resolvable:$true] %s234
          %237 = dma.hbm_to_vmem [thread:$0]  %s233, 16, %s235, %s225
        $region28: #{tpu_custom_call.1} parent=19 // pred_fallthru
          _
        // Predicated region
        $region29: #{tpu_custom_call.1} parent=19 // pred_check
          %p238 = pneg %p134
        $region30: #{tpu_custom_call.1} parent=19 // pred_check_branch
          %240 = sbr.rel (%p238) target = $region32
        $region31: #{tpu_custom_call.1} parent=19 // pred_region
          %s241 = sand.u32 %s124, 1
          %s242 = scalar_lea.sflag [#allocation11], %s241
          %s243 = sand.u32 %s124, 1
          %s244 = smul.addr %s243, 64
          %s245 = scalar_lea.vmem [#allocation10], %s244
          %s246 = smul.u32 16, %s28
          %248 = vsyncadd %s242, 0
          %s249 = smul.addr %s246, 2
          %s250 = sadd.s32 %s29, %s249
          %s251 = smul.addr %s250, 4
          %s252 = scalar_lea.hbm %s3, %s251
          %s253 = sshll.u32 %s252, 4
          %s254 = int_to_ptr.hbm [resolvable:$true] %s253
          %s255 = sshll.u32 %s245, 4
          %s256 = int_to_ptr.vmem [resolvable:$true] %s255
          %261 = dma.hbm_to_vmem [thread:$0]  %s254, 1024, %s256, %s242, 128, 64, 4
        $region32: #{tpu_custom_call.1} parent=19 // pred_fallthru
          _
      $region20: #{tpu_custom_call.1} parent=5 // pred_fallthru
        _
      %p262 = scmp.le.s32.totalorder 1, %s20
      %p263 = scmp.lt.s32.totalorder %s20, 9
      %p264 = pnand %p262, %p263
      %p265 = pneg %p264
      // Predicated region
      $region33: #{tpu_custom_call.1} parent=5 // pred_check
        _
      $region34: #{tpu_custom_call.1} parent=5 // pred_check_branch
        %267 = sbr.rel (%p264) target = $region36
      $region35: #{tpu_custom_call.1} parent=5 // pred_region
        %s268 = ssub.s32 %s20, 1
        // Predicated region
        $region37: #{tpu_custom_call.1} parent=35 // pred_check
          %p269 = pneg %p60
        $region38: #{tpu_custom_call.1} parent=35 // pred_check_branch
          %271 = sbr.rel (%p269) target = $region40
        $region39: #{tpu_custom_call.1} parent=35 // pred_region
          %273 = dma.done [#allocation5], 4096
        $region40: #{tpu_custom_call.1} parent=35 // pred_fallthru
          _
        %s274 = sand.u32 %s25, 1
        %s275 = scalar_lea.sflag [#allocation8], %s274
        %s276 = sand.u32 %s73, 1
        %s277 = smul.addr %s276, 128
        %s278 = scalar_lea.vmem [#allocation7], %s277
        // Predicated region
        $region41: #{tpu_custom_call.1} parent=35 // pred_check
          %p279 = pneg %p86
        $region42: #{tpu_custom_call.1} parent=35 // pred_check_branch
          %281 = sbr.rel (%p279) target = $region44
        $region43: #{tpu_custom_call.1} parent=35 // pred_region
          %283 = dma.done %s275, 2048
        $region44: #{tpu_custom_call.1} parent=35 // pred_fallthru
          _
        %s284 = sand.u32 %s25, 1
        %s285 = scalar_lea.sflag [#allocation8], %s284
        %s286 = sand.u32 %s99, 1
        %s287 = scalar_lea.vmem [#allocation9], %s286
        // Predicated region
        $region45: #{tpu_custom_call.1} parent=35 // pred_check
          %p288 = pneg %p112
        $region46: #{tpu_custom_call.1} parent=35 // pred_check_branch
          %290 = sbr.rel (%p288) target = $region48
        $region47: #{tpu_custom_call.1} parent=35 // pred_region
          %292 = dma.done %s285, 16
        $region48: #{tpu_custom_call.1} parent=35 // pred_fallthru
          _
        %s293 = sand.u32 %s127, 1
        %s294 = scalar_lea.sflag [#allocation11], %s293
        %s295 = sand.u32 %s127, 1
        %s296 = smul.addr %s295, 64
        %s297 = scalar_lea.vmem [#allocation10], %s296
        // Predicated region
        $region49: #{tpu_custom_call.1} parent=35 // pred_check
          %p298 = pneg %p140
        $region50: #{tpu_custom_call.1} parent=35 // pred_check_branch
          %300 = sbr.rel (%p298) target = $region52
        $region51: #{tpu_custom_call.1} parent=35 // pred_region
          %302 = dma.done %s294, 1024
        $region52: #{tpu_custom_call.1} parent=35 // pred_fallthru
          _
        %p303 = pneg %p60
        %p304 = pneg %p57
        %s305 = sand.u32 %s25, 1
        %s306 = scalar_lea.sflag [#allocation8], %s305
        %s307 = sand.u32 %s73, 1
        %s308 = smul.addr %s307, 128
        %s309 = scalar_lea.vmem [#allocation7], %s308
        %p310 = pneg %p86
        %p311 = pneg %p83
        %s312 = sand.u32 %s25, 1
        %s313 = scalar_lea.sflag [#allocation8], %s312
        %s314 = sand.u32 %s99, 1
        %s315 = scalar_lea.vmem [#allocation9], %s314
        %p316 = pneg %p112
        %p317 = pneg %p109
        %s318 = sand.u32 %s127, 1
        %s319 = scalar_lea.sflag [#allocation11], %s318
        %s320 = sand.u32 %s127, 1
        %s321 = smul.addr %s320, 64
        %s322 = scalar_lea.vmem [#allocation10], %s321
        %p323 = pneg %p140
        %p324 = pneg %p137
        %p325 = pneg %p166
        %p326 = pneg %p163
        %s327 = sand.u32 %s153, 1
        %s328 = scalar_lea.sflag [#allocation6], %s327
        %s329 = sand.u32 %s153, 1
        %s330 = smul.addr %s329, 128
        %s331 = scalar_lea.vmem [#allocation12], %s330
        %s332 = smul.u32 16, %s31
        %s333 = smul.u32 16, %s31
        %p334 = scmp.eq.s32.totalorder %s30, 0
        %p335 = scmp.eq.s32.totalorder %s31, 0
        %p336 = pnand %p334, %p335
        %p337 = pneg %p336
        %p338 = scmp.eq.s32.totalorder %s32, 0
        %p339 = pnand %p337, %p338
        %p340 = pneg %p339
        // Predicated region
        $region53: #{tpu_custom_call.1} parent=35 // pred_check
          _
        $region54: #{tpu_custom_call.1} parent=35 // pred_check_branch
          %342 = sbr.rel (%p339) target = $region56
        $region55: #{tpu_custom_call.1} parent=35 // pred_region
          %v343 = vld [vmem:[#allocation4] sm:$0xff]
          %v344 = vld [vmem:[#allocation4 + $0x8] sm:$0xff]
          %v345 = vld [vmem:[#allocation4 + $0x10] sm:$0xff]
          %v346 = vld [vmem:[#allocation4 + $0x18] sm:$0xff]
          %v347 = vld [vmem:[#allocation4 + $0x20] sm:$0xff]
          %v348 = vld [vmem:[#allocation4 + $0x28] sm:$0xff]
          %v349 = vld [vmem:[#allocation4 + $0x30] sm:$0xff]
          %v350 = vld [vmem:[#allocation4 + $0x38] sm:$0xff]
          %v351 = vld [vmem:[#allocation4 + $0x40] sm:$0xff]
          %v352 = vld [vmem:[#allocation4 + $0x48] sm:$0xff]
          %v353 = vld [vmem:[#allocation4 + $0x50] sm:$0xff]
          %v354 = vld [vmem:[#allocation4 + $0x58] sm:$0xff]
          %v355 = vld [vmem:[#allocation4 + $0x60] sm:$0xff]
          %v356 = vld [vmem:[#allocation4 + $0x68] sm:$0xff]
          %v357 = vld [vmem:[#allocation4 + $0x70] sm:$0xff]
          %v358 = vld [vmem:[#allocation4 + $0x78] sm:$0xff]
          %v359 = vld [vmem:[#allocation4 + $0x80] sm:$0xff]
          %v360 = vld [vmem:[#allocation4 + $0x88] sm:$0xff]
          %v361 = vld [vmem:[#allocation4 + $0x90] sm:$0xff]
          %v362 = vld [vmem:[#allocation4 + $0x98] sm:$0xff]
          %v363 = vld [vmem:[#allocation4 + $0xa0] sm:$0xff]
          %v364 = vld [vmem:[#allocation4 + $0xa8] sm:$0xff]
          %v365 = vld [vmem:[#allocation4 + $0xb0] sm:$0xff]
          %v366 = vld [vmem:[#allocation4 + $0xb8] sm:$0xff]
          %v367 = vld [vmem:[#allocation4 + $0xc0] sm:$0xff]
          %v368 = vld [vmem:[#allocation4 + $0xc8] sm:$0xff]
          %v369 = vld [vmem:[#allocation4 + $0xd0] sm:$0xff]
          %v370 = vld [vmem:[#allocation4 + $0xd8] sm:$0xff]
          %v371 = vld [vmem:[#allocation4 + $0xe0] sm:$0xff]
          %v372 = vld [vmem:[#allocation4 + $0xe8] sm:$0xff]
          %v373 = vld [vmem:[#allocation4 + $0xf0] sm:$0xff]
          %v374 = vld [vmem:[#allocation4 + $0xf8] sm:$0xff]
          %375 = vst [vmem:[#allocation2] sm:$0xff] %v343
          %376 = vst [vmem:[#allocation2 + $0x8] sm:$0xff] %v344
          %377 = vst [vmem:[#allocation2 + $0x10] sm:$0xff] %v345
          %378 = vst [vmem:[#allocation2 + $0x18] sm:$0xff] %v346
          %379 = vst [vmem:[#allocation2 + $0x20] sm:$0xff] %v347
          %380 = vst [vmem:[#allocation2 + $0x28] sm:$0xff] %v348
          %381 = vst [vmem:[#allocation2 + $0x30] sm:$0xff] %v349
          %382 = vst [vmem:[#allocation2 + $0x38] sm:$0xff] %v350
          %383 = vst [vmem:[#allocation2 + $0x40] sm:$0xff] %v351
          %384 = vst [vmem:[#allocation2 + $0x48] sm:$0xff] %v352
          %385 = vst [vmem:[#allocation2 + $0x50] sm:$0xff] %v353
          %386 = vst [vmem:[#allocation2 + $0x58] sm:$0xff] %v354
          %387 = vst [vmem:[#allocation2 + $0x60] sm:$0xff] %v355
          %388 = vst [vmem:[#allocation2 + $0x68] sm:$0xff] %v356
          %389 = vst [vmem:[#allocation2 + $0x70] sm:$0xff] %v357
          %390 = vst [vmem:[#allocation2 + $0x78] sm:$0xff] %v358
          %391 = vst [vmem:[#allocation2 + $0x80] sm:$0xff] %v359
          %392 = vst [vmem:[#allocation2 + $0x88] sm:$0xff] %v360
          %393 = vst [vmem:[#allocation2 + $0x90] sm:$0xff] %v361
          %394 = vst [vmem:[#allocation2 + $0x98] sm:$0xff] %v362
          %395 = vst [vmem:[#allocation2 + $0xa0] sm:$0xff] %v363
          %396 = vst [vmem:[#allocation2 + $0xa8] sm:$0xff] %v364
          %397 = vst [vmem:[#allocation2 + $0xb0] sm:$0xff] %v365
          %398 = vst [vmem:[#allocation2 + $0xb8] sm:$0xff] %v366
          %399 = vst [vmem:[#allocation2 + $0xc0] sm:$0xff] %v367
          %400 = vst [vmem:[#allocation2 + $0xc8] sm:$0xff] %v368
          %401 = vst [vmem:[#allocation2 + $0xd0] sm:$0xff] %v369
          %402 = vst [vmem:[#allocation2 + $0xd8] sm:$0xff] %v370
          %403 = vst [vmem:[#allocation2 + $0xe0] sm:$0xff] %v371
          %404 = vst [vmem:[#allocation2 + $0xe8] sm:$0xff] %v372
          %405 = vst [vmem:[#allocation2 + $0xf0] sm:$0xff] %v373
          %406 = vst [vmem:[#allocation2 + $0xf8] sm:$0xff] %v374
        $region56: #{tpu_custom_call.1} parent=35 // pred_fallthru
          _
        %p407 = pnand %p335, %p338
        %p408 = pneg %p407
        // Predicated region
        $region57: #{tpu_custom_call.1} parent=35 // pred_check
          _
        $region58: #{tpu_custom_call.1} parent=35 // pred_check_branch
          %410 = sbr.rel (%p407) target = $region60
        $region59: #{tpu_custom_call.1} parent=35 // pred_region
          %v411 = vld [vmem:[#allocation2] sm:$0xff]
          %v412 = vld [vmem:[#allocation2 + $0x8] sm:$0xff]
          %v413 = vld [vmem:[#allocation2 + $0x10] sm:$0xff]
          %v414 = vld [vmem:[#allocation2 + $0x18] sm:$0xff]
          %v415 = vld [vmem:[#allocation2 + $0x20] sm:$0xff]
          %v416 = vld [vmem:[#allocation2 + $0x28] sm:$0xff]
          %v417 = vld [vmem:[#allocation2 + $0x30] sm:$0xff]
          %v418 = vld [vmem:[#allocation2 + $0x38] sm:$0xff]
          %v419 = vld [vmem:[#allocation2 + $0x40] sm:$0xff]
          %v420 = vld [vmem:[#allocation2 + $0x48] sm:$0xff]
          %v421 = vld [vmem:[#allocation2 + $0x50] sm:$0xff]
          %v422 = vld [vmem:[#allocation2 + $0x58] sm:$0xff]
          %v423 = vld [vmem:[#allocation2 + $0x60] sm:$0xff]
          %v424 = vld [vmem:[#allocation2 + $0x68] sm:$0xff]
          %v425 = vld [vmem:[#allocation2 + $0x70] sm:$0xff]
          %v426 = vld [vmem:[#allocation2 + $0x78] sm:$0xff]
          %v427 = vld [vmem:[#allocation2 + $0x80] sm:$0xff]
          %v428 = vld [vmem:[#allocation2 + $0x88] sm:$0xff]
          %v429 = vld [vmem:[#allocation2 + $0x90] sm:$0xff]
          %v430 = vld [vmem:[#allocation2 + $0x98] sm:$0xff]
          %v431 = vld [vmem:[#allocation2 + $0xa0] sm:$0xff]
          %v432 = vld [vmem:[#allocation2 + $0xa8] sm:$0xff]
          %v433 = vld [vmem:[#allocation2 + $0xb0] sm:$0xff]
          %v434 = vld [vmem:[#allocation2 + $0xb8] sm:$0xff]
          %v435 = vld [vmem:[#allocation2 + $0xc0] sm:$0xff]
          %v436 = vld [vmem:[#allocation2 + $0xc8] sm:$0xff]
          %v437 = vld [vmem:[#allocation2 + $0xd0] sm:$0xff]
          %v438 = vld [vmem:[#allocation2 + $0xd8] sm:$0xff]
          %v439 = vld [vmem:[#allocation2 + $0xe0] sm:$0xff]
          %v440 = vld [vmem:[#allocation2 + $0xe8] sm:$0xff]
          %v441 = vld [vmem:[#allocation2 + $0xf0] sm:$0xff]
          %v442 = vld [vmem:[#allocation2 + $0xf8] sm:$0xff]
          %v443 = vld [vmem:[%s278] sm:$0xf]
          %v444 = vld [vmem:[%s278 + $0x4] sm:$0xf]
          %v445 = vld [vmem:[%s278 + $0x8] sm:$0xf]
          %v446 = vld [vmem:[%s278 + $0xc] sm:$0xf]
          %v447 = vld [vmem:[%s278 + $0x10] sm:$0xf]
          %v448 = vld [vmem:[%s278 + $0x14] sm:$0xf]
          %v449 = vld [vmem:[%s278 + $0x18] sm:$0xf]
          %v450 = vld [vmem:[%s278 + $0x1c] sm:$0xf]
          %v451 = vld [vmem:[%s278 + $0x20] sm:$0xf]
          %v452 = vld [vmem:[%s278 + $0x24] sm:$0xf]
          %v453 = vld [vmem:[%s278 + $0x28] sm:$0xf]
          %v454 = vld [vmem:[%s278 + $0x2c] sm:$0xf]
          %v455 = vld [vmem:[%s278 + $0x30] sm:$0xf]
          %v456 = vld [vmem:[%s278 + $0x34] sm:$0xf]
          %v457 = vld [vmem:[%s278 + $0x38] sm:$0xf]
          %v458 = vld [vmem:[%s278 + $0x3c] sm:$0xf]
          %v459 = vld [vmem:[%s278 + $0x40] sm:$0xf]
          %v460 = vld [vmem:[%s278 + $0x44] sm:$0xf]
          %v461 = vld [vmem:[%s278 + $0x48] sm:$0xf]
          %v462 = vld [vmem:[%s278 + $0x4c] sm:$0xf]
          %v463 = vld [vmem:[%s278 + $0x50] sm:$0xf]
          %v464 = vld [vmem:[%s278 + $0x54] sm:$0xf]
          %v465 = vld [vmem:[%s278 + $0x58] sm:$0xf]
          %v466 = vld [vmem:[%s278 + $0x5c] sm:$0xf]
          %v467 = vld [vmem:[%s278 + $0x60] sm:$0xf]
          %v468 = vld [vmem:[%s278 + $0x64] sm:$0xf]
          %v469 = vld [vmem:[%s278 + $0x68] sm:$0xf]
          %v470 = vld [vmem:[%s278 + $0x6c] sm:$0xf]
          %v471 = vld [vmem:[%s278 + $0x70] sm:$0xf]
          %v472 = vld [vmem:[%s278 + $0x74] sm:$0xf]
          %v473 = vld [vmem:[%s278 + $0x78] sm:$0xf]
          %v474 = vld [vmem:[%s278 + $0x7c] sm:$0xf]
          %v507 = vunpack.c.l.b16 %v411
          %v508 = vunpack.c.h.b16 %v411
          %v509 = vunpack.c.l.b16 %v412
          %v510 = vunpack.c.h.b16 %v412
          %v511 = vunpack.c.l.b16 %v413
          %v512 = vunpack.c.h.b16 %v413
          %v513 = vunpack.c.l.b16 %v414
          %v514 = vunpack.c.h.b16 %v414
          %v515 = vunpack.c.l.b16 %v415
          %v516 = vunpack.c.h.b16 %v415
          %v517 = vunpack.c.l.b16 %v416
          %v518 = vunpack.c.h.b16 %v416
          %v519 = vunpack.c.l.b16 %v417
          %v520 = vunpack.c.h.b16 %v417
          %v521 = vunpack.c.l.b16 %v418
          %v522 = vunpack.c.h.b16 %v418
          %v523 = vunpack.c.l.b16 %v419
          %v524 = vunpack.c.h.b16 %v419
          %v525 = vunpack.c.l.b16 %v420
          %v526 = vunpack.c.h.b16 %v420
          %v527 = vunpack.c.l.b16 %v421
          %v528 = vunpack.c.h.b16 %v421
          %v529 = vunpack.c.l.b16 %v422
          %v530 = vunpack.c.h.b16 %v422
          %v531 = vunpack.c.l.b16 %v423
          %v532 = vunpack.c.h.b16 %v423
          %v533 = vunpack.c.l.b16 %v424
          %v534 = vunpack.c.h.b16 %v424
          %v535 = vunpack.c.l.b16 %v425
          %v536 = vunpack.c.h.b16 %v425
          %v537 = vunpack.c.l.b16 %v426
          %v538 = vunpack.c.h.b16 %v426
          %v539 = vunpack.c.l.b16 %v427
          %v540 = vunpack.c.h.b16 %v427
          %v541 = vunpack.c.l.b16 %v428
          %v542 = vunpack.c.h.b16 %v428
          %v543 = vunpack.c.l.b16 %v429
          %v544 = vunpack.c.h.b16 %v429
          %v545 = vunpack.c.l.b16 %v430
          %v546 = vunpack.c.h.b16 %v430
          %v547 = vunpack.c.l.b16 %v431
          %v548 = vunpack.c.h.b16 %v431
          %v549 = vunpack.c.l.b16 %v432
          %v550 = vunpack.c.h.b16 %v432
          %v551 = vunpack.c.l.b16 %v433
          %v552 = vunpack.c.h.b16 %v433
          %v553 = vunpack.c.l.b16 %v434
          %v554 = vunpack.c.h.b16 %v434
          %v555 = vunpack.c.l.b16 %v435
          %v556 = vunpack.c.h.b16 %v435
          %v557 = vunpack.c.l.b16 %v436
          %v558 = vunpack.c.h.b16 %v436
          %v559 = vunpack.c.l.b16 %v437
          %v560 = vunpack.c.h.b16 %v437
          %v561 = vunpack.c.l.b16 %v438
          %v562 = vunpack.c.h.b16 %v438
          %v563 = vunpack.c.l.b16 %v439
          %v564 = vunpack.c.h.b16 %v439
          %v565 = vunpack.c.l.b16 %v440
          %v566 = vunpack.c.h.b16 %v440
          %v567 = vunpack.c.l.b16 %v441
          %v568 = vunpack.c.h.b16 %v441
          %v569 = vunpack.c.l.b16 %v442
          %v570 = vunpack.c.h.b16 %v442
          %v571 = vpack.c.b16 %v509, %v507
          %v572 = vpack.c.b16 %v510, %v508
          %v573 = vpack.c.b16 %v513, %v511
          %v574 = vpack.c.b16 %v514, %v512
          %v575 = vpack.c.b16 %v517, %v515
          %v576 = vpack.c.b16 %v518, %v516
          %v577 = vpack.c.b16 %v521, %v519
          %v578 = vpack.c.b16 %v522, %v520
          %v579 = vpack.c.b16 %v525, %v523
          %v580 = vpack.c.b16 %v526, %v524
          %v581 = vpack.c.b16 %v529, %v527
          %v582 = vpack.c.b16 %v530, %v528
          %v583 = vpack.c.b16 %v533, %v531
          %v584 = vpack.c.b16 %v534, %v532
          %v585 = vpack.c.b16 %v537, %v535
          %v586 = vpack.c.b16 %v538, %v536
          %v587 = vpack.c.b16 %v541, %v539
          %v588 = vpack.c.b16 %v542, %v540
          %v589 = vpack.c.b16 %v545, %v543
          %v590 = vpack.c.b16 %v546, %v544
          %v591 = vpack.c.b16 %v549, %v547
          %v592 = vpack.c.b16 %v550, %v548
          %v593 = vpack.c.b16 %v553, %v551
          %v594 = vpack.c.b16 %v554, %v552
          %v595 = vpack.c.b16 %v557, %v555
          %v596 = vpack.c.b16 %v558, %v556
          %v597 = vpack.c.b16 %v561, %v559
          %v598 = vpack.c.b16 %v562, %v560
          %v599 = vpack.c.b16 %v565, %v563
          %v600 = vpack.c.b16 %v566, %v564
          %v601 = vpack.c.b16 %v569, %v567
          %v602 = vpack.c.b16 %v570, %v568
          %v667 = vunpack.c.l.b16 %v443
          %v668 = vunpack.c.l.b16 %v444
          %v669 = vunpack.c.l.b16 %v445
          %v670 = vunpack.c.l.b16 %v446
          %v671 = vunpack.c.l.b16 %v447
          %v672 = vunpack.c.l.b16 %v448
          %v673 = vunpack.c.l.b16 %v449
          %v674 = vunpack.c.l.b16 %v450
          %v675 = vunpack.c.l.b16 %v451
          %v676 = vunpack.c.l.b16 %v452
          %v677 = vunpack.c.l.b16 %v453
          %v678 = vunpack.c.l.b16 %v454
          %v679 = vunpack.c.l.b16 %v455
          %v680 = vunpack.c.l.b16 %v456
          %v681 = vunpack.c.l.b16 %v457
          %v682 = vunpack.c.l.b16 %v458
          %v683 = vunpack.c.l.b16 %v459
          %v684 = vunpack.c.l.b16 %v460
          %v685 = vunpack.c.l.b16 %v461
          %v686 = vunpack.c.l.b16 %v462
          %v687 = vunpack.c.l.b16 %v463
          %v688 = vunpack.c.l.b16 %v464
          %v689 = vunpack.c.l.b16 %v465
          %v690 = vunpack.c.l.b16 %v466
          %v691 = vunpack.c.l.b16 %v467
          %v692 = vunpack.c.l.b16 %v468
          %v693 = vunpack.c.l.b16 %v469
          %v694 = vunpack.c.l.b16 %v470
          %v695 = vunpack.c.l.b16 %v471
          %v696 = vunpack.c.l.b16 %v472
          %v697 = vunpack.c.l.b16 %v473
          %v698 = vunpack.c.l.b16 %v474
          %v699 = vpack.c.b16 %v668, %v667
          %v700 = vpack.c.b16 %v670, %v669
          %v701 = vpack.c.b16 %v672, %v671
          %v702 = vpack.c.b16 %v674, %v673
          %v703 = vpack.c.b16 %v676, %v675
          %v704 = vpack.c.b16 %v678, %v677
          %v705 = vpack.c.b16 %v680, %v679
          %v706 = vpack.c.b16 %v682, %v681
          %v707 = vpack.c.b16 %v684, %v683
          %v708 = vpack.c.b16 %v686, %v685
          %v709 = vpack.c.b16 %v688, %v687
          %v710 = vpack.c.b16 %v690, %v689
          %v711 = vpack.c.b16 %v692, %v691
          %v712 = vpack.c.b16 %v694, %v693
          %v713 = vpack.c.b16 %v696, %v695
          %v714 = vpack.c.b16 %v698, %v697
          %731 = vmatpush.bf16.msra.mxu0 %v706
          %732 = vmatpush.bf16.msra.mxu0 %v705
          %733 = vmatpush.bf16.msra.mxu0 %v704
          %734 = vmatpush.bf16.msra.mxu0 %v703
          %735 = vmatpush.bf16.msra.mxu0 %v702
          %736 = vmatpush.bf16.msra.mxu0 %v701
          %737 = vmatpush.bf16.msra.mxu0 %v700
          %738 = vmatpush.bf16.msra.mxu0 %v699
          %739 = vmatmul.bf16.gmra.mxu0 %v571
          %v740 = vpop.f32.mrf.mxu0
          %v741 = vadd.f32 0.0, %v740
          %v742 = vpop.f32.mrf.mxu0
          %v743 = vadd.f32 0.0, %v742
          %744 = vmatmul.bf16.gmra.mxu0 %v573
          %v745 = vpop.f32.mrf.mxu0
          %v746 = vadd.f32 0.0, %v745
          %v747 = vpop.f32.mrf.mxu0
          %v748 = vadd.f32 0.0, %v747
          %749 = vmatmul.bf16.gmra.mxu0 %v575
          %v750 = vpop.f32.mrf.mxu0
          %v751 = vadd.f32 0.0, %v750
          %v752 = vpop.f32.mrf.mxu0
          %v753 = vadd.f32 0.0, %v752
          %754 = vmatmul.bf16.gmra.mxu0 %v577
          %v755 = vpop.f32.mrf.mxu0
          %v756 = vadd.f32 0.0, %v755
          %v757 = vpop.f32.mrf.mxu0
          %v758 = vadd.f32 0.0, %v757
          %759 = vmatmul.bf16.gmra.mxu0 %v579
          %v760 = vpop.f32.mrf.mxu0
          %v761 = vadd.f32 0.0, %v760
          %v762 = vpop.f32.mrf.mxu0
          %v763 = vadd.f32 0.0, %v762
          %764 = vmatmul.bf16.gmra.mxu0 %v581
          %v765 = vpop.f32.mrf.mxu0
          %v766 = vadd.f32 0.0, %v765
          %v767 = vpop.f32.mrf.mxu0
          %v768 = vadd.f32 0.0, %v767
          %769 = vmatmul.bf16.gmra.mxu0 %v583
          %v770 = vpop.f32.mrf.mxu0
          %v771 = vadd.f32 0.0, %v770
          %v772 = vpop.f32.mrf.mxu0
          %v773 = vadd.f32 0.0, %v772
          %774 = vmatmul.bf16.gmra.mxu0 %v585
          %v775 = vpop.f32.mrf.mxu0
          %v776 = vadd.f32 0.0, %v775
          %v777 = vpop.f32.mrf.mxu0
          %v778 = vadd.f32 0.0, %v777
          %779 = vmatmul.bf16.gmra.mxu0 %v587
          %v780 = vpop.f32.mrf.mxu0
          %v781 = vadd.f32 0.0, %v780
          %v782 = vpop.f32.mrf.mxu0
          %v783 = vadd.f32 0.0, %v782
          %784 = vmatmul.bf16.gmra.mxu0 %v589
          %v785 = vpop.f32.mrf.mxu0
          %v786 = vadd.f32 0.0, %v785
          %v787 = vpop.f32.mrf.mxu0
          %v788 = vadd.f32 0.0, %v787
          %789 = vmatmul.bf16.gmra.mxu0 %v591
          %v790 = vpop.f32.mrf.mxu0
          %v791 = vadd.f32 0.0, %v790
          %v792 = vpop.f32.mrf.mxu0
          %v793 = vadd.f32 0.0, %v792
          %794 = vmatmul.bf16.gmra.mxu0 %v593
          %v795 = vpop.f32.mrf.mxu0
          %v796 = vadd.f32 0.0, %v795
          %v797 = vpop.f32.mrf.mxu0
          %v798 = vadd.f32 0.0, %v797
          %799 = vmatmul.bf16.gmra.mxu0 %v595
          %v800 = vpop.f32.mrf.mxu0
          %v801 = vadd.f32 0.0, %v800
          %v802 = vpop.f32.mrf.mxu0
          %v803 = vadd.f32 0.0, %v802
          %804 = vmatmul.bf16.gmra.mxu0 %v597
          %v805 = vpop.f32.mrf.mxu0
          %v806 = vadd.f32 0.0, %v805
          %v807 = vpop.f32.mrf.mxu0
          %v808 = vadd.f32 0.0, %v807
          %809 = vmatmul.bf16.gmra.mxu0 %v599
          %v810 = vpop.f32.mrf.mxu0
          %v811 = vadd.f32 0.0, %v810
          %v812 = vpop.f32.mrf.mxu0
          %v813 = vadd.f32 0.0, %v812
          %814 = vmatmul.bf16.gmra.mxu0 %v601
          %v815 = vpop.f32.mrf.mxu0
          %v816 = vadd.f32 0.0, %v815
          %v817 = vpop.f32.mrf.mxu0
          %v818 = vadd.f32 0.0, %v817
          %819 = vdwg.mxu0
          %820 = vmatpush.bf16.msra.mxu0 %v714
          %821 = vmatpush.bf16.msra.mxu0 %v713
          %822 = vmatpush.bf16.msra.mxu0 %v712
          %823 = vmatpush.bf16.msra.mxu0 %v711
          %824 = vmatpush.bf16.msra.mxu0 %v710
          %825 = vmatpush.bf16.msra.mxu0 %v709
          %826 = vmatpush.bf16.msra.mxu0 %v708
          %827 = vmatpush.bf16.msra.mxu0 %v707
          %828 = vmatmul.bf16.gmra.mxu0 %v572
          %v829 = vpop.f32.mrf.mxu0
          %v830 = vadd.f32 %v741, %v829
          %v831 = vpop.f32.mrf.mxu0
          %v832 = vadd.f32 %v743, %v831
          %833 = vmatmul.bf16.gmra.mxu0 %v574
          %v834 = vpop.f32.mrf.mxu0
          %v835 = vadd.f32 %v746, %v834
          %v836 = vpop.f32.mrf.mxu0
          %v837 = vadd.f32 %v748, %v836
          %838 = vmatmul.bf16.gmra.mxu0 %v576
          %v839 = vpop.f32.mrf.mxu0
          %v840 = vadd.f32 %v751, %v839
          %v841 = vpop.f32.mrf.mxu0
          %v842 = vadd.f32 %v753, %v841
          %843 = vmatmul.bf16.gmra.mxu0 %v578
          %v844 = vpop.f32.mrf.mxu0
          %v845 = vadd.f32 %v756, %v844
          %v846 = vpop.f32.mrf.mxu0
          %v847 = vadd.f32 %v758, %v846
          %848 = vmatmul.bf16.gmra.mxu0 %v580
          %v849 = vpop.f32.mrf.mxu0
          %v850 = vadd.f32 %v761, %v849
          %v851 = vpop.f32.mrf.mxu0
          %v852 = vadd.f32 %v763, %v851
          %853 = vmatmul.bf16.gmra.mxu0 %v582
          %v854 = vpop.f32.mrf.mxu0
          %v855 = vadd.f32 %v766, %v854
          %v856 = vpop.f32.mrf.mxu0
          %v857 = vadd.f32 %v768, %v856
          %858 = vmatmul.bf16.gmra.mxu0 %v584
          %v859 = vpop.f32.mrf.mxu0
          %v860 = vadd.f32 %v771, %v859
          %v861 = vpop.f32.mrf.mxu0
          %v862 = vadd.f32 %v773, %v861
          %863 = vmatmul.bf16.gmra.mxu0 %v586
          %v864 = vpop.f32.mrf.mxu0
          %v865 = vadd.f32 %v776, %v864
          %v866 = vpop.f32.mrf.mxu0
          %v867 = vadd.f32 %v778, %v866
          %868 = vmatmul.bf16.gmra.mxu0 %v588
          %v869 = vpop.f32.mrf.mxu0
          %v870 = vadd.f32 %v781, %v869
          %v871 = vpop.f32.mrf.mxu0
          %v872 = vadd.f32 %v783, %v871
          %873 = vmatmul.bf16.gmra.mxu0 %v590
          %v874 = vpop.f32.mrf.mxu0
          %v875 = vadd.f32 %v786, %v874
          %v876 = vpop.f32.mrf.mxu0
          %v877 = vadd.f32 %v788, %v876
          %878 = vmatmul.bf16.gmra.mxu0 %v592
          %v879 = vpop.f32.mrf.mxu0
          %v880 = vadd.f32 %v791, %v879
          %v881 = vpop.f32.mrf.mxu0
          %v882 = vadd.f32 %v793, %v881
          %883 = vmatmul.bf16.gmra.mxu0 %v594
          %v884 = vpop.f32.mrf.mxu0
          %v885 = vadd.f32 %v796, %v884
          %v886 = vpop.f32.mrf.mxu0
          %v887 = vadd.f32 %v798, %v886
          %888 = vmatmul.bf16.gmra.mxu0 %v596
          %v889 = vpop.f32.mrf.mxu0
          %v890 = vadd.f32 %v801, %v889
          %v891 = vpop.f32.mrf.mxu0
          %v892 = vadd.f32 %v803, %v891
          %893 = vmatmul.bf16.gmra.mxu0 %v598
          %v894 = vpop.f32.mrf.mxu0
          %v895 = vadd.f32 %v806, %v894
          %v896 = vpop.f32.mrf.mxu0
          %v897 = vadd.f32 %v808, %v896
          %898 = vmatmul.bf16.gmra.mxu0 %v600
          %v899 = vpop.f32.mrf.mxu0
          %v900 = vadd.f32 %v811, %v899
          %v901 = vpop.f32.mrf.mxu0
          %v902 = vadd.f32 %v813, %v901
          %903 = vmatmul.bf16.gmra.mxu0 %v602
          %v904 = vpop.f32.mrf.mxu0
          %v905 = vadd.f32 %v816, %v904
          %v906 = vpop.f32.mrf.mxu0
          %v907 = vadd.f32 %v818, %v906
          %908 = vdwg.mxu0
          %v909 = vpack.c.bf16 %v830, %v830
          %v910 = vpack.c.bf16 %v832, %v832
          %v911 = vpack.c.bf16 %v835, %v835
          %v912 = vpack.c.bf16 %v837, %v837
          %v913 = vpack.c.bf16 %v840, %v840
          %v914 = vpack.c.bf16 %v842, %v842
          %v915 = vpack.c.bf16 %v845, %v845
          %v916 = vpack.c.bf16 %v847, %v847
          %v917 = vpack.c.bf16 %v850, %v850
          %v918 = vpack.c.bf16 %v852, %v852
          %v919 = vpack.c.bf16 %v855, %v855
          %v920 = vpack.c.bf16 %v857, %v857
          %v921 = vpack.c.bf16 %v860, %v860
          %v922 = vpack.c.bf16 %v862, %v862
          %v923 = vpack.c.bf16 %v865, %v865
          %v924 = vpack.c.bf16 %v867, %v867
          %v925 = vpack.c.bf16 %v870, %v870
          %v926 = vpack.c.bf16 %v872, %v872
          %v927 = vpack.c.bf16 %v875, %v875
          %v928 = vpack.c.bf16 %v877, %v877
          %v929 = vpack.c.bf16 %v880, %v880
          %v930 = vpack.c.bf16 %v882, %v882
          %v931 = vpack.c.bf16 %v885, %v885
          %v932 = vpack.c.bf16 %v887, %v887
          %v933 = vpack.c.bf16 %v890, %v890
          %v934 = vpack.c.bf16 %v892, %v892
          %v935 = vpack.c.bf16 %v895, %v895
          %v936 = vpack.c.bf16 %v897, %v897
          %v937 = vpack.c.bf16 %v900, %v900
          %v938 = vpack.c.bf16 %v902, %v902
          %v939 = vpack.c.bf16 %v905, %v905
          %v940 = vpack.c.bf16 %v907, %v907
          %941 = vst [vmem:[#allocation3] sm:$0xf] %v909
          %942 = vst [vmem:[#allocation3 + $0x4] sm:$0xf] %v910
          %943 = vst [vmem:[#allocation3 + $0x8] sm:$0xf] %v911
          %944 = vst [vmem:[#allocation3 + $0xc] sm:$0xf] %v912
          %945 = vst [vmem:[#allocation3 + $0x10] sm:$0xf] %v913
          %946 = vst [vmem:[#allocation3 + $0x14] sm:$0xf] %v914
          %947 = vst [vmem:[#allocation3 + $0x18] sm:$0xf] %v915
          %948 = vst [vmem:[#allocation3 + $0x1c] sm:$0xf] %v916
          %949 = vst [vmem:[#allocation3 + $0x20] sm:$0xf] %v917
          %950 = vst [vmem:[#allocation3 + $0x24] sm:$0xf] %v918
          %951 = vst [vmem:[#allocation3 + $0x28] sm:$0xf] %v919
          %952 = vst [vmem:[#allocation3 + $0x2c] sm:$0xf] %v920
          %953 = vst [vmem:[#allocation3 + $0x30] sm:$0xf] %v921
          %954 = vst [vmem:[#allocation3 + $0x34] sm:$0xf] %v922
          %955 = vst [vmem:[#allocation3 + $0x38] sm:$0xf] %v923
          %956 = vst [vmem:[#allocation3 + $0x3c] sm:$0xf] %v924
          %957 = vst [vmem:[#allocation3 + $0x40] sm:$0xf] %v925
          %958 = vst [vmem:[#allocation3 + $0x44] sm:$0xf] %v926
          %959 = vst [vmem:[#allocation3 + $0x48] sm:$0xf] %v927
          %960 = vst [vmem:[#allocation3 + $0x4c] sm:$0xf] %v928
          %961 = vst [vmem:[#allocation3 + $0x50] sm:$0xf] %v929
          %962 = vst [vmem:[#allocation3 + $0x54] sm:$0xf] %v930
          %963 = vst [vmem:[#allocation3 + $0x58] sm:$0xf] %v931
          %964 = vst [vmem:[#allocation3 + $0x5c] sm:$0xf] %v932
          %965 = vst [vmem:[#allocation3 + $0x60] sm:$0xf] %v933
          %966 = vst [vmem:[#allocation3 + $0x64] sm:$0xf] %v934
          %967 = vst [vmem:[#allocation3 + $0x68] sm:$0xf] %v935
          %968 = vst [vmem:[#allocation3 + $0x6c] sm:$0xf] %v936
          %969 = vst [vmem:[#allocation3 + $0x70] sm:$0xf] %v937
          %970 = vst [vmem:[#allocation3 + $0x74] sm:$0xf] %v938
          %971 = vst [vmem:[#allocation3 + $0x78] sm:$0xf] %v939
          %972 = vst [vmem:[#allocation3 + $0x7c] sm:$0xf] %v940
        $region60: #{tpu_custom_call.1} parent=35 // pred_fallthru
          _
        // Predicated region
        $region61: #{tpu_custom_call.1} parent=35 // pred_check
          %p973 = pneg %p338
        $region62: #{tpu_custom_call.1} parent=35 // pred_check_branch
          %975 = sbr.rel (%p973) target = $region64
        $region63: #{tpu_custom_call.1} parent=35 // pred_region
          %976 = vst [vmem:[%s331] sm:$0xff] 0.0
          %977 = vst [vmem:[%s331 + $0x8] sm:$0xff] 0.0
          %978 = vst [vmem:[%s331 + $0x10] sm:$0xff] 0.0
          %979 = vst [vmem:[%s331 + $0x18] sm:$0xff] 0.0
          %980 = vst [vmem:[%s331 + $0x20] sm:$0xff] 0.0
          %981 = vst [vmem:[%s331 + $0x28] sm:$0xff] 0.0
          %982 = vst [vmem:[%s331 + $0x30] sm:$0xff] 0.0
          %983 = vst [vmem:[%s331 + $0x38] sm:$0xff] 0.0
          %984 = vst [vmem:[%s331 + $0x40] sm:$0xff] 0.0
          %985 = vst [vmem:[%s331 + $0x48] sm:$0xff] 0.0
          %986 = vst [vmem:[%s331 + $0x50] sm:$0xff] 0.0
          %987 = vst [vmem:[%s331 + $0x58] sm:$0xff] 0.0
          %988 = vst [vmem:[%s331 + $0x60] sm:$0xff] 0.0
          %989 = vst [vmem:[%s331 + $0x68] sm:$0xff] 0.0
          %990 = vst [vmem:[%s331 + $0x70] sm:$0xff] 0.0
          %991 = vst [vmem:[%s331 + $0x78] sm:$0xff] 0.0
        $region64: #{tpu_custom_call.1} parent=35 // pred_fallthru
          _
        %s992 = smul.u32 %s32, 128
        %v993 = vld [vmem:[%s331] sm:$0xff]
        %v994 = vld [vmem:[%s331 + $0x8] sm:$0xff]
        %v995 = vld [vmem:[%s331 + $0x10] sm:$0xff]
        %v996 = vld [vmem:[%s331 + $0x18] sm:$0xff]
        %v997 = vld [vmem:[%s331 + $0x20] sm:$0xff]
        %v998 = vld [vmem:[%s331 + $0x28] sm:$0xff]
        %v999 = vld [vmem:[%s331 + $0x30] sm:$0xff]
        %v1000 = vld [vmem:[%s331 + $0x38] sm:$0xff]
        %v1001 = vld [vmem:[%s331 + $0x40] sm:$0xff]
        %v1002 = vld [vmem:[%s331 + $0x48] sm:$0xff]
        %v1003 = vld [vmem:[%s331 + $0x50] sm:$0xff]
        %v1004 = vld [vmem:[%s331 + $0x58] sm:$0xff]
        %v1005 = vld [vmem:[%s331 + $0x60] sm:$0xff]
        %v1006 = vld [vmem:[%s331 + $0x68] sm:$0xff]
        %v1007 = vld [vmem:[%s331 + $0x70] sm:$0xff]
        %v1008 = vld [vmem:[%s331 + $0x78] sm:$0xff]
        %v1009 = vld [vmem:[%s297] sm:$0xf]
        %v1010 = vld [vmem:[%s297 + $0x4] sm:$0xf]
        %v1011 = vld [vmem:[%s297 + $0x8] sm:$0xf]
        %v1012 = vld [vmem:[%s297 + $0xc] sm:$0xf]
        %v1013 = vld [vmem:[%s297 + $0x10] sm:$0xf]
        %v1014 = vld [vmem:[%s297 + $0x14] sm:$0xf]
        %v1015 = vld [vmem:[%s297 + $0x18] sm:$0xf]
        %v1016 = vld [vmem:[%s297 + $0x1c] sm:$0xf]
        %v1017 = vld [vmem:[%s297 + $0x20] sm:$0xf]
        %v1018 = vld [vmem:[%s297 + $0x24] sm:$0xf]
        %v1019 = vld [vmem:[%s297 + $0x28] sm:$0xf]
        %v1020 = vld [vmem:[%s297 + $0x2c] sm:$0xf]
        %v1021 = vld [vmem:[%s297 + $0x30] sm:$0xf]
        %v1022 = vld [vmem:[%s297 + $0x34] sm:$0xf]
        %v1023 = vld [vmem:[%s297 + $0x38] sm:$0xf]
        %v1024 = vld [vmem:[%s297 + $0x3c] sm:$0xf]
        %s1025 = sshra.s32 %s992, 3
        %s1026 = sand.u32 %s992, 7
        %s1027 = smul.addr %s1025, 4
        %s1028 = scalar_lea.vmem [#allocation3], %s1027
        %v1029 = vld [vmem:[%s1028] sm:$0xf]
        %v1030 = vld [vmem:[%s1028 + $0x4] sm:$0xf]
        %v1031 = vld [vmem:[%s1028 + $0x8] sm:$0xf]
        %v1032 = vld [vmem:[%s1028 + $0xc] sm:$0xf]
        %v1033 = vld [vmem:[%s1028 + $0x10] sm:$0xf]
        %v1034 = vld [vmem:[%s1028 + $0x14] sm:$0xf]
        %v1035 = vld [vmem:[%s1028 + $0x18] sm:$0xf]
        %v1036 = vld [vmem:[%s1028 + $0x1c] sm:$0xf]
        %v1037 = vld [vmem:[%s1028 + $0x20] sm:$0xf]
        %v1038 = vld [vmem:[%s1028 + $0x24] sm:$0xf]
        %v1039 = vld [vmem:[%s1028 + $0x28] sm:$0xf]
        %v1040 = vld [vmem:[%s1028 + $0x2c] sm:$0xf]
        %v1041 = vld [vmem:[%s1028 + $0x30] sm:$0xf]
        %v1042 = vld [vmem:[%s1028 + $0x34] sm:$0xf]
        %v1043 = vld [vmem:[%s1028 + $0x38] sm:$0xf]
        %v1044 = vld [vmem:[%s1028 + $0x3c] sm:$0xf]
        %v1061 = vunpack.c.l.b16 %v1009
        %v1062 = vunpack.c.l.b16 %v1010
        %v1063 = vunpack.c.l.b16 %v1011
        %v1064 = vunpack.c.l.b16 %v1012
        %v1065 = vunpack.c.l.b16 %v1013
        %v1066 = vunpack.c.l.b16 %v1014
        %v1067 = vunpack.c.l.b16 %v1015
        %v1068 = vunpack.c.l.b16 %v1016
        %v1069 = vunpack.c.l.b16 %v1017
        %v1070 = vunpack.c.l.b16 %v1018
        %v1071 = vunpack.c.l.b16 %v1019
        %v1072 = vunpack.c.l.b16 %v1020
        %v1073 = vunpack.c.l.b16 %v1021
        %v1074 = vunpack.c.l.b16 %v1022
        %v1075 = vunpack.c.l.b16 %v1023
        %v1076 = vunpack.c.l.b16 %v1024
        %v1077 = vpack.c.b16 %v1062, %v1061
        %v1078 = vpack.c.b16 %v1064, %v1063
        %v1079 = vpack.c.b16 %v1066, %v1065
        %v1080 = vpack.c.b16 %v1068, %v1067
        %v1081 = vpack.c.b16 %v1070, %v1069
        %v1082 = vpack.c.b16 %v1072, %v1071
        %v1083 = vpack.c.b16 %v1074, %v1073
        %v1084 = vpack.c.b16 %v1076, %v1075
        %v1109 = vunpack.c.l.b16 %v1029
        %v1110 = vunpack.c.l.b16 %v1030
        %v1111 = vunpack.c.l.b16 %v1031
        %v1112 = vunpack.c.l.b16 %v1032
        %v1113 = vunpack.c.l.b16 %v1033
        %v1114 = vunpack.c.l.b16 %v1034
        %v1115 = vunpack.c.l.b16 %v1035
        %v1116 = vunpack.c.l.b16 %v1036
        %v1117 = vunpack.c.l.b16 %v1037
        %v1118 = vunpack.c.l.b16 %v1038
        %v1119 = vunpack.c.l.b16 %v1039
        %v1120 = vunpack.c.l.b16 %v1040
        %v1121 = vunpack.c.l.b16 %v1041
        %v1122 = vunpack.c.l.b16 %v1042
        %v1123 = vunpack.c.l.b16 %v1043
        %v1124 = vunpack.c.l.b16 %v1044
        %v1125 = vpack.c.b16 %v1110, %v1109
        %v1126 = vpack.c.b16 %v1112, %v1111
        %v1127 = vpack.c.b16 %v1114, %v1113
        %v1128 = vpack.c.b16 %v1116, %v1115
        %v1129 = vpack.c.b16 %v1118, %v1117
        %v1130 = vpack.c.b16 %v1120, %v1119
        %v1131 = vpack.c.b16 %v1122, %v1121
        %v1132 = vpack.c.b16 %v1124, %v1123
        %1141 = vmatpush.bf16.msra.mxu0 %v1132
        %1142 = vmatpush.bf16.msra.mxu0 %v1131
        %1143 = vmatpush.bf16.msra.mxu0 %v1130
        %1144 = vmatpush.bf16.msra.mxu0 %v1129
        %1145 = vmatpush.bf16.msra.mxu0 %v1128
        %1146 = vmatpush.bf16.msra.mxu0 %v1127
        %1147 = vmatpush.bf16.msra.mxu0 %v1126
        %1148 = vmatpush.bf16.msra.mxu0 %v1125
        %1149 = vmatmul.bf16.gmra.mxu0 %v1077
        %v1150 = vpop.f32.mrf.mxu0
        %v1151 = vadd.f32 0.0, %v1150
        %v1152 = vpop.f32.mrf.mxu0
        %v1153 = vadd.f32 0.0, %v1152
        %1154 = vmatmul.bf16.gmra.mxu0 %v1078
        %v1155 = vpop.f32.mrf.mxu0
        %v1156 = vadd.f32 0.0, %v1155
        %v1157 = vpop.f32.mrf.mxu0
        %v1158 = vadd.f32 0.0, %v1157
        %1159 = vmatmul.bf16.gmra.mxu0 %v1079
        %v1160 = vpop.f32.mrf.mxu0
        %v1161 = vadd.f32 0.0, %v1160
        %v1162 = vpop.f32.mrf.mxu0
        %v1163 = vadd.f32 0.0, %v1162
        %1164 = vmatmul.bf16.gmra.mxu0 %v1080
        %v1165 = vpop.f32.mrf.mxu0
        %v1166 = vadd.f32 0.0, %v1165
        %v1167 = vpop.f32.mrf.mxu0
        %v1168 = vadd.f32 0.0, %v1167
        %1169 = vmatmul.bf16.gmra.mxu0 %v1081
        %v1170 = vpop.f32.mrf.mxu0
        %v1171 = vadd.f32 0.0, %v1170
        %v1172 = vpop.f32.mrf.mxu0
        %v1173 = vadd.f32 0.0, %v1172
        %1174 = vmatmul.bf16.gmra.mxu0 %v1082
        %v1175 = vpop.f32.mrf.mxu0
        %v1176 = vadd.f32 0.0, %v1175
        %v1177 = vpop.f32.mrf.mxu0
        %v1178 = vadd.f32 0.0, %v1177
        %1179 = vmatmul.bf16.gmra.mxu0 %v1083
        %v1180 = vpop.f32.mrf.mxu0
        %v1181 = vadd.f32 0.0, %v1180
        %v1182 = vpop.f32.mrf.mxu0
        %v1183 = vadd.f32 0.0, %v1182
        %1184 = vmatmul.bf16.gmra.mxu0 %v1084
        %v1185 = vpop.f32.mrf.mxu0
        %v1186 = vadd.f32 0.0, %v1185
        %v1187 = vpop.f32.mrf.mxu0
        %v1188 = vadd.f32 0.0, %v1187
        %1189 = vdwg.mxu0
        %v1190 = vadd.f32 %v993, %v1151
        %v1191 = vadd.f32 %v994, %v1153
        %v1192 = vadd.f32 %v995, %v1156
        %v1193 = vadd.f32 %v996, %v1158
        %v1194 = vadd.f32 %v997, %v1161
        %v1195 = vadd.f32 %v998, %v1163
        %v1196 = vadd.f32 %v999, %v1166
        %v1197 = vadd.f32 %v1000, %v1168
        %v1198 = vadd.f32 %v1001, %v1171
        %v1199 = vadd.f32 %v1002, %v1173
        %v1200 = vadd.f32 %v1003, %v1176
        %v1201 = vadd.f32 %v1004, %v1178
        %v1202 = vadd.f32 %v1005, %v1181
        %v1203 = vadd.f32 %v1006, %v1183
        %v1204 = vadd.f32 %v1007, %v1186
        %v1205 = vadd.f32 %v1008, %v1188
        %1206 = vst [vmem:[%s331] sm:$0xff] %v1190
        %1207 = vst [vmem:[%s331 + $0x8] sm:$0xff] %v1191
        %1208 = vst [vmem:[%s331 + $0x10] sm:$0xff] %v1192
        %1209 = vst [vmem:[%s331 + $0x18] sm:$0xff] %v1193
        %1210 = vst [vmem:[%s331 + $0x20] sm:$0xff] %v1194
        %1211 = vst [vmem:[%s331 + $0x28] sm:$0xff] %v1195
        %1212 = vst [vmem:[%s331 + $0x30] sm:$0xff] %v1196
        %1213 = vst [vmem:[%s331 + $0x38] sm:$0xff] %v1197
        %1214 = vst [vmem:[%s331 + $0x40] sm:$0xff] %v1198
        %1215 = vst [vmem:[%s331 + $0x48] sm:$0xff] %v1199
        %1216 = vst [vmem:[%s331 + $0x50] sm:$0xff] %v1200
        %1217 = vst [vmem:[%s331 + $0x58] sm:$0xff] %v1201
        %1218 = vst [vmem:[%s331 + $0x60] sm:$0xff] %v1202
        %1219 = vst [vmem:[%s331 + $0x68] sm:$0xff] %v1203
        %1220 = vst [vmem:[%s331 + $0x70] sm:$0xff] %v1204
        %1221 = vst [vmem:[%s331 + $0x78] sm:$0xff] %v1205
        %p1222 = scmp.eq.s32.totalorder %s32, 1
        // Predicated region
        $region65: #{tpu_custom_call.1} parent=35 // pred_check
          %p1223 = pneg %p1222
        $region66: #{tpu_custom_call.1} parent=35 // pred_check_branch
          %1225 = sbr.rel (%p1223) target = $region68
        $region67: #{tpu_custom_call.1} parent=35 // pred_region
          %v1226 = vld [vmem:[%s331] sm:$0xff]
          %v1227 = vld [vmem:[%s331 + $0x8] sm:$0xff]
          %v1228 = vld [vmem:[%s331 + $0x10] sm:$0xff]
          %v1229 = vld [vmem:[%s331 + $0x18] sm:$0xff]
          %v1230 = vld [vmem:[%s331 + $0x20] sm:$0xff]
          %v1231 = vld [vmem:[%s331 + $0x28] sm:$0xff]
          %v1232 = vld [vmem:[%s331 + $0x30] sm:$0xff]
          %v1233 = vld [vmem:[%s331 + $0x38] sm:$0xff]
          %v1234 = vld [vmem:[%s331 + $0x40] sm:$0xff]
          %v1235 = vld [vmem:[%s331 + $0x48] sm:$0xff]
          %v1236 = vld [vmem:[%s331 + $0x50] sm:$0xff]
          %v1237 = vld [vmem:[%s331 + $0x58] sm:$0xff]
          %v1238 = vld [vmem:[%s331 + $0x60] sm:$0xff]
          %v1239 = vld [vmem:[%s331 + $0x68] sm:$0xff]
          %v1240 = vld [vmem:[%s331 + $0x70] sm:$0xff]
          %v1241 = vld [vmem:[%s331 + $0x78] sm:$0xff]
          %v1242 = vld [vmem:[%s287] sm:$0x1]
          %v1244 = vperm.slane %v1242, 0
          %v1246 = vadd.f32 %v1226, %v1244
          %v1247 = vadd.f32 %v1227, %v1244
          %v1248 = vadd.f32 %v1228, %v1244
          %v1249 = vadd.f32 %v1229, %v1244
          %v1250 = vadd.f32 %v1230, %v1244
          %v1251 = vadd.f32 %v1231, %v1244
          %v1252 = vadd.f32 %v1232, %v1244
          %v1253 = vadd.f32 %v1233, %v1244
          %v1254 = vadd.f32 %v1234, %v1244
          %v1255 = vadd.f32 %v1235, %v1244
          %v1256 = vadd.f32 %v1236, %v1244
          %v1257 = vadd.f32 %v1237, %v1244
          %v1258 = vadd.f32 %v1238, %v1244
          %v1259 = vadd.f32 %v1239, %v1244
          %v1260 = vadd.f32 %v1240, %v1244
          %v1261 = vadd.f32 %v1241, %v1244
          %p1262 = scmp.lt.s32.totalorder %s30, 1
          %v1263 = vmax.f32 %v1246, 0.0
          %v1264 = vmax.f32 %v1247, 0.0
          %v1265 = vmax.f32 %v1248, 0.0
          %v1266 = vmax.f32 %v1249, 0.0
          %v1267 = vmax.f32 %v1250, 0.0
          %v1268 = vmax.f32 %v1251, 0.0
          %v1269 = vmax.f32 %v1252, 0.0
          %v1270 = vmax.f32 %v1253, 0.0
          %v1271 = vmax.f32 %v1254, 0.0
          %v1272 = vmax.f32 %v1255, 0.0
          %v1273 = vmax.f32 %v1256, 0.0
          %v1274 = vmax.f32 %v1257, 0.0
          %v1275 = vmax.f32 %v1258, 0.0
          %v1276 = vmax.f32 %v1259, 0.0
          %v1277 = vmax.f32 %v1260, 0.0
          %v1278 = vmax.f32 %v1261, 0.0
          %s1279 = scalar_select %p1262, 1, 0
          %v1280 = vstv %s1279
          %vm1281 = vcmp.eq.s32.totalorder %v1280, 1
          %v1282 = vsel %vm1281, %v1263, %v1246
          %v1283 = vsel %vm1281, %v1264, %v1247
          %v1284 = vsel %vm1281, %v1265, %v1248
          %v1285 = vsel %vm1281, %v1266, %v1249
          %v1286 = vsel %vm1281, %v1267, %v1250
          %v1287 = vsel %vm1281, %v1268, %v1251
          %v1288 = vsel %vm1281, %v1269, %v1252
          %v1289 = vsel %vm1281, %v1270, %v1253
          %v1290 = vsel %vm1281, %v1271, %v1254
          %v1291 = vsel %vm1281, %v1272, %v1255
          %v1292 = vsel %vm1281, %v1273, %v1256
          %v1293 = vsel %vm1281, %v1274, %v1257
          %v1294 = vsel %vm1281, %v1275, %v1258
          %v1295 = vsel %vm1281, %v1276, %v1259
          %v1296 = vsel %vm1281, %v1277, %v1260
          %v1297 = vsel %vm1281, %v1278, %v1261
          %1298 = vst [vmem:[%s331] sm:$0xff] %v1282
          %1299 = vst [vmem:[%s331 + $0x8] sm:$0xff] %v1283
          %1300 = vst [vmem:[%s331 + $0x10] sm:$0xff] %v1284
          %1301 = vst [vmem:[%s331 + $0x18] sm:$0xff] %v1285
          %1302 = vst [vmem:[%s331 + $0x20] sm:$0xff] %v1286
          %1303 = vst [vmem:[%s331 + $0x28] sm:$0xff] %v1287
          %1304 = vst [vmem:[%s331 + $0x30] sm:$0xff] %v1288
          %1305 = vst [vmem:[%s331 + $0x38] sm:$0xff] %v1289
          %1306 = vst [vmem:[%s331 + $0x40] sm:$0xff] %v1290
          %1307 = vst [vmem:[%s331 + $0x48] sm:$0xff] %v1291
          %1308 = vst [vmem:[%s331 + $0x50] sm:$0xff] %v1292
          %1309 = vst [vmem:[%s331 + $0x58] sm:$0xff] %v1293
          %1310 = vst [vmem:[%s331 + $0x60] sm:$0xff] %v1294
          %1311 = vst [vmem:[%s331 + $0x68] sm:$0xff] %v1295
          %1312 = vst [vmem:[%s331 + $0x70] sm:$0xff] %v1296
          %1313 = vst [vmem:[%s331 + $0x78] sm:$0xff] %v1297
          %s1314 = smul.u32 %s31, 128
          %v1315 = vpack.c.bf16 %v1282, %v1282
          %v1316 = vpack.c.bf16 %v1283, %v1283
          %v1317 = vpack.c.bf16 %v1284, %v1284
          %v1318 = vpack.c.bf16 %v1285, %v1285
          %v1319 = vpack.c.bf16 %v1286, %v1286
          %v1320 = vpack.c.bf16 %v1287, %v1287
          %v1321 = vpack.c.bf16 %v1288, %v1288
          %v1322 = vpack.c.bf16 %v1289, %v1289
          %v1323 = vpack.c.bf16 %v1290, %v1290
          %v1324 = vpack.c.bf16 %v1291, %v1291
          %v1325 = vpack.c.bf16 %v1292, %v1292
          %v1326 = vpack.c.bf16 %v1293, %v1293
          %v1327 = vpack.c.bf16 %v1294, %v1294
          %v1328 = vpack.c.bf16 %v1295, %v1295
          %v1329 = vpack.c.bf16 %v1296, %v1296
          %v1330 = vpack.c.bf16 %v1297, %v1297
          %s1331 = sshra.s32 %s1314, 3
          %s1332 = sand.u32 %s1314, 7
          %s1333 = smul.u32 %s1331, 2
          %s1334 = smul.addr %s1333, 4
          %s1335 = scalar_lea.vmem [#allocation2], %s1334
          %1336 = vst [vmem:[%s1335] sm:$0xf] %v1315
          %1337 = vst [vmem:[%s1335 + $0x8] sm:$0xf] %v1316
          %1338 = vst [vmem:[%s1335 + $0x10] sm:$0xf] %v1317
          %1339 = vst [vmem:[%s1335 + $0x18] sm:$0xf] %v1318
          %1340 = vst [vmem:[%s1335 + $0x20] sm:$0xf] %v1319
          %1341 = vst [vmem:[%s1335 + $0x28] sm:$0xf] %v1320
          %1342 = vst [vmem:[%s1335 + $0x30] sm:$0xf] %v1321
          %1343 = vst [vmem:[%s1335 + $0x38] sm:$0xf] %v1322
          %1344 = vst [vmem:[%s1335 + $0x40] sm:$0xf] %v1323
          %1345 = vst [vmem:[%s1335 + $0x48] sm:$0xf] %v1324
          %1346 = vst [vmem:[%s1335 + $0x50] sm:$0xf] %v1325
          %1347 = vst [vmem:[%s1335 + $0x58] sm:$0xf] %v1326
          %1348 = vst [vmem:[%s1335 + $0x60] sm:$0xf] %v1327
          %1349 = vst [vmem:[%s1335 + $0x68] sm:$0xf] %v1328
          %1350 = vst [vmem:[%s1335 + $0x70] sm:$0xf] %v1329
          %1351 = vst [vmem:[%s1335 + $0x78] sm:$0xf] %v1330
        $region68: #{tpu_custom_call.1} parent=35 // pred_fallthru
          _
        %s1352 = sand.u32 %s153, 1
        %s1353 = scalar_lea.sflag [#allocation6], %s1352
        %s1354 = sand.u32 %s153, 1
        %s1355 = smul.addr %s1354, 128
        %s1356 = scalar_lea.vmem [#allocation12], %s1355
        // Predicated region
        $region69: #{tpu_custom_call.1} parent=35 // pred_check
          %p1357 = pneg %p163
        $region70: #{tpu_custom_call.1} parent=35 // pred_check_branch
          %1359 = sbr.rel (%p1357) target = $region72
        $region71: #{tpu_custom_call.1} parent=35 // pred_region
          %s1360 = smul.u32 16, %s31
          %1362 = vsyncadd %s1353, 0
          %s1363 = smul.addr %s1360, 8
          %s1364 = scalar_lea.hbm %s4, %s1363
          %s1365 = sshll.u32 %s1356, 4
          %s1366 = int_to_ptr.vmem [resolvable:$true] %s1365
          %s1367 = sshll.u32 %s1364, 4
          %s1368 = int_to_ptr.hbm [resolvable:$true] %s1367
          %1373 = dma.vmem_to_hbm [thread:$0]  %s1366, 2048, %s1368, %s1353, 128, 128, 8
        $region72: #{tpu_custom_call.1} parent=35 // pred_fallthru
          _
      $region36: #{tpu_custom_call.1} parent=5 // pred_fallthru
        _
      %p1374 = scmp.le.s32.totalorder 2, %s20
      // Predicated region
      $region73: #{tpu_custom_call.1} parent=5 // pred_check
        %p1375 = pneg %p1374
      $region74: #{tpu_custom_call.1} parent=5 // pred_check_branch
        %1377 = sbr.rel (%p1375) target = $region76
      $region75: #{tpu_custom_call.1} parent=5 // pred_region
        %s1378 = ssub.s32 %s20, 2
        // Predicated region
        $region77: #{tpu_custom_call.1} parent=75 // pred_check
          %p1379 = pneg %p169
        $region78: #{tpu_custom_call.1} parent=75 // pred_check_branch
          %1381 = sbr.rel (%p1379) target = $region80
        $region79: #{tpu_custom_call.1} parent=75 // pred_region
          %s1382 = sand.u32 %s154, 1
          %s1383 = scalar_lea.sflag [#allocation6], %s1382
          %s1384 = sand.u32 %s154, 1
          %s1385 = smul.addr %s1384, 128
          %s1386 = scalar_lea.vmem [#allocation12], %s1385
          %1388 = dma.done %s1383, 2048
        $region80: #{tpu_custom_call.1} parent=75 // pred_fallthru
          _
      $region76: #{tpu_custom_call.1} parent=5 // pred_fallthru
        _
    $region6: #{tpu_custom_call.1} parent=1 // loop_footer
      %s24 = sadd.s32 1, %s20
    $region7: #{tpu_custom_call.1} parent=1 // loop_footer_branch
      %19 = sbr.rel target = $region3
    $region8: #{tpu_custom_call.1} parent=1 // loop_exit
      _
    %1389 = vsyncpa [#allocation5], 1
    %s1390 = scalar_lea.sflag [#allocation5], 1
    %1391 = vsyncpa %s1390, 1
    %1392 = vsyncpa [#allocation8], 1
    %s1393 = scalar_lea.sflag [#allocation8], 1
    %1394 = vsyncpa %s1393, 1
    %1395 = vsyncpa [#allocation11], 1
    %s1396 = scalar_lea.sflag [#allocation11], 1
    %1397 = vsyncpa %s1396, 1
    %1398 = vsyncpa [#allocation6], 1
    %s1399 = scalar_lea.sflag [#allocation6], 1
    %1400 = vsyncpa %s1399, 1

</llo_original>
